<compile_context>
chip_gen: v6e
topology: v6e:2x2x1
jax: 0.10.0
libtpu: 0.0.40
codegen_flags: <defaults>
</compile_context>

<pallas_src>
import functools

import jax
import jax.numpy as jnp
from jax.experimental import pallas as pl
from jax.experimental.pallas import tpu as pltpu

_LANE = 128
_VMEM_LIMIT = 48 * 1024 * 1024      # explicit scoped-VMEM ceiling (< v7x's 64 MiB physical)
_VMEM_BUDGET = 40 * 1024 * 1024     # per-grid-step working-set budget used for tiling


# ----------------------------------------------------------------------------
# Pallas kernel: fused unfold + embedding Linear, tap-regrouped strided conv
# ----------------------------------------------------------------------------
def _softsplit_kernel(x_ref, w_ref, b_ref, o_ref, *, rb):
    """One block of `fb` (frame x row-tile) entries.

    x_ref : (fb, ght+rb-1, WB, K)   space-to-depth frames + row halo (bf16)
    w_ref : (rb, rb, K, Cp)         tap-group-packed embedding weight (bf16)
    b_ref : (1, Cp)                 embedding bias, zero-padded to Cp (f32)
    o_ref : (fb, ght, gw, Cp)       output tokens (f32)
    """
    fb, ght, gw, cp = o_ref.shape
    k_dim = x_ref.shape[-1]
    m = fb * ght * gw

    # Initialize the accumulator with the (broadcast) bias: one VPU pass saved.
    acc = jnp.broadcast_to(b_ref[...], (m, cp))
    for cbo in range(rb):
        # ONE sublane-offset column slice per column block (not per tap).
        xc = x_ref[:, :, cbo:cbo + gw, :]                       # (fb, HBt, gw, K)
        for rbo in range(rb):
            # Row-block slice is a major-dim slice (free).  Flatten to 2-D for the
            # MXU; layout-preserving when gw % 8 == 0.
            patches = xc[:, rbo:rbo + ght].reshape(m, k_dim)
            acc = acc + jnp.dot(patches, w_ref[rbo, cbo],
                                preferred_element_type=jnp.float32)
    o_ref[...] = acc.reshape(fb, ght, gw, cp).astype(o_ref.dtype)


# ----------------------------------------------------------------------------
# pallas_call wrapper
# ----------------------------------------------------------------------------
def softsplit_pallas(x_tiled, w_packed, b_packed, *, fb, rb, ght, gw,
                     single_buffer_consts=True):
    n, hbt, wb, k_dim = x_tiled.shape
    cp = w_packed.shape[-1]

    if single_buffer_consts and hasattr(pl, "Buffered"):
        def const_spec(shape, imap):
            # Constant blocks (index_map never changes): no double buffering.
            return pl.BlockSpec(shape, imap,
                                pipeline_mode=pl.Buffered(buffer_count=1))
    else:
        def const_spec(shape, imap):
            return pl.BlockSpec(shape, imap)

    flops = 2 * n * ght * gw * (rb * rb * k_dim) * cp
    bytes_accessed = (x_tiled.size * x_tiled.dtype.itemsize
                      + w_packed.size * w_packed.dtype.itemsize
                      + b_packed.size * b_packed.dtype.itemsize
                      + n * ght * gw * cp * 4)

    return pl.pallas_call(
        functools.partial(_softsplit_kernel, rb=rb),
        out_shape=jax.ShapeDtypeStruct((n, ght, gw, cp), jnp.float32),
        grid=(n // fb,),
        in_specs=[
            pl.BlockSpec((fb, hbt, wb, k_dim), lambda i: (i, 0, 0, 0)),
            const_spec((rb, rb, k_dim, cp), lambda i: (0, 0, 0, 0)),
            const_spec((1, cp), lambda i: (0, 0)),
        ],
        out_specs=pl.BlockSpec((fb, ght, gw, cp), lambda i: (i, 0, 0, 0)),
        compiler_params=pltpu.CompilerParams(
            dimension_semantics=("parallel",),
            vmem_limit_bytes=_VMEM_LIMIT),
        cost_estimate=pl.CostEstimate(flops=flops, transcendentals=0,
                                      bytes_accessed=bytes_accessed),
    )(x_tiled, w_packed, b_packed)


# ----------------------------------------------------------------------------
# Tiling heuristic: largest blocks that fit the VMEM budget with >= 4 grid steps
# ----------------------------------------------------------------------------
def _divisors(n):
    return [d for d in range(1, n + 1) if n % d == 0]


def _step_bytes(fb, ght, rb, wb, k_dim, cp, gw):
    x_blk = fb * (ght + rb - 1) * wb * k_dim * 2     # bf16, double-buffered
    o_blk = fb * ght * gw * cp * 4                   # f32,  double-buffered
    consts = rb * rb * k_dim * cp * 2 + cp * 4       # single-buffered
    return 2 * x_blk + 2 * o_blk + consts


def _choose_tiles(bt, gh, gw, rb, wb, k_dim, cp):
    ght = 1
    for d in reversed(_divisors(gh)):
        if _step_bytes(1, d, rb, wb, k_dim, cp, gw) <= _VMEM_BUDGET:
            ght = d
            break
    nt = gh // ght
    n = bt * nt
    want_steps = min(4, n)                           # >= 2 per TensorCore on v7x
    fb = 1
    for d in reversed(_divisors(n)):
        if (n // d) >= want_steps and _step_bytes(d, ght, rb, wb, k_dim, cp, gw) <= _VMEM_BUDGET:
            fb = d
            break
    return fb, ght, nt


# ----------------------------------------------------------------------------
# Module wrapper (holds the nn.Linear parameters; layout plumbing only)
# ----------------------------------------------------------------------------
class SoftSplitPallas:
    """Pallas port of SoftSplit: Unfold(k, s, p) -> Linear(k*k*C_in, C_hid)."""

    def __init__(self, in_channels, out_channels, kernel_size, stride=1, padding=0,
                 *, key, compute_dtype=jnp.bfloat16):
        self.c_in = in_channels
        self.c_hid = out_channels
        self.k = kernel_size
        self.s = stride
        self.p = padding
        self.compute_dtype = compute_dtype

        kdim = kernel_size * kernel_size * in_channels
        k1, k2 = jax.random.split(key)
        # same parameter shapes as the torch module: nn.Linear (out, in), (out,)
        self.w_emb = 0.05 * jax.random.normal(k1, (out_channels, kdim), jnp.float32)
        self.b_emb = 0.05 * jax.random.normal(k2, (out_channels,), jnp.float32)

        # ---- one-time weight/bias packing (hoisted out of the forward pass) -----
        k_, s_, c = kernel_size, stride, in_channels
        rb = -(-k_ // s_)                              # ceil(k / s)  block offsets
        cp = -(-out_channels // _LANE) * _LANE         # lane-dense output channels
        self.rb = rb
        self.cp = cp
        self.k_dim = s_ * s_ * c                       # MXU contraction depth / tap group
        # (C_hid, C*k*k) -> (ki, kj, c, o); zero-pad taps to rb*s and out-chans to cp;
        # fold (rr, cc, c) into the contraction dim:  W[rbo, cbo, (rr*s+cc)*C + c, o].
        w4 = (self.w_emb.reshape(out_channels, c, k_, k_)
              .transpose(2, 3, 1, 0))                                    # (k, k, c, o)
        w4 = jnp.pad(w4, ((0, rb * s_ - k_), (0, rb * s_ - k_),
                          (0, 0), (0, cp - out_channels)))
        w_packed = (w4.reshape(rb, s_, rb, s_, c, cp)
                    .transpose(0, 2, 1, 3, 4, 5)                # (rbo, cbo, rr, cc, c, o)
                    .reshape(rb, rb, self.k_dim, cp))
        self.w_packed = w_packed.astype(compute_dtype)
        self.b_packed = jnp.pad(self.b_emb, (0, cp - out_channels)).reshape(1, cp)
        self._single_buffer_consts = None              # resolved on first call

    def __call__(self, x):
        B, T, C, H, W = x.shape
        k, s, p, rb, cp = self.k, self.s, self.p, self.rb, self.cp
        gh = (H + 2 * p - k) // s + 1
        gw = (W + 2 * p - k) // s + 1
        bt = B * T
        hb = gh + rb - 1                               # row blocks incl. tap halo
        wb = gw + rb - 1
        hp, wp = s * hb, s * wb                        # padded extent actually consumed

        # ---- layout plumbing: pad + space-to-depth + bf16 cast in one fused chain --
        x4 = x.reshape(bt, C, H, W)
        x_pad = jnp.pad(x4, ((0, 0), (0, 0),
                             (p, max(0, hp - H - p)), (p, max(0, wp - W - p))))
        x_pad = x_pad[:, :, :hp, :wp]
        x_s2d = (x_pad.reshape(bt, C, hb, s, wb, s)
                 .transpose(0, 2, 4, 3, 5, 1)                  # (bt, hb, wb, rr, cc, c)
                 .reshape(bt, hb, wb, self.k_dim)
                 .astype(self.compute_dtype))

        # ---- row-tile (with explicit halo) x frame-block tiling -------------------
        fb, ght, nt = _choose_tiles(bt, gh, gw, rb, wb, self.k_dim, cp)
        hbt = ght + rb - 1
        if nt == 1:
            x_tiled = x_s2d
        else:
            row_idx = (jnp.arange(nt)[:, None] * ght
                       + jnp.arange(hbt)[None, :])             # overlapping row tiles
            x_tiled = jnp.take(x_s2d, row_idx, axis=1).reshape(
                bt * nt, hbt, wb, self.k_dim)

        out = self._run(x_tiled, fb=fb, ght=ght, gw=gw)

        out = out.reshape(bt, gh, gw, cp)[..., :self.c_hid]    # un-tile + drop lane pad
        return out.reshape(B, T, gh, gw, self.c_hid)

    def _run(self, x_tiled, *, fb, ght, gw):
        if self._single_buffer_consts is None:
            # Probe once: single-buffered constants save VMEM (matters on v7x), but
            # fall back gracefully if this JAX build rejects pl.Buffered(1).
            try:
                out = softsplit_pallas(x_tiled, self.w_packed, self.b_packed,
                                       fb=fb, rb=self.rb, ght=ght, gw=gw,
                                       single_buffer_consts=True)
                self._single_buffer_consts = True
                return out
            except Exception:
                self._single_buffer_consts = False
        return softsplit_pallas(x_tiled, self.w_packed, self.b_packed,
                                fb=fb, rb=self.rb, ght=ght, gw=gw,
                                single_buffer_consts=self._single_buffer_consts)


# ----------------------------------------------------------------------------
# pure-JAX reference (mirrors the torch forward exactly: Unfold -> permute -> Linear)
# ----------------------------------------------------------------------------
def reference(x, w_emb, b_emb, k, s, p):
    B, T, C, H, W = x.shape
    gh = (H + 2 * p - k) // s + 1
    gw = (W + 2 * p - k) // s + 1
    xp = jnp.pad(x.reshape(B * T, C, H, W), ((0, 0), (0, 0), (p, p), (p, p)))
    cols = []
    for c in range(C):                        # nn.Unfold ordering: c, ki, kj
        for ki in range(k):
            for kj in range(k):
                sl = xp[:, c, ki:ki + s * (gh - 1) + 1:s, kj:kj + s * (gw - 1) + 1:s]
                cols.append(sl.reshape(B * T, gh * gw))
    cols = jnp.stack(cols, axis=1)                                # (BT, C*k*k, L)
    y = jnp.einsum('nkl,ok->nlo', cols, w_emb) + b_emb            # permute + Linear
    return y.reshape(B, T, gh, gw, -1)


# ----------------------------------------------------------------------------
if __name__ == "__main__":
    def run_case(seed, B, T, C_in, C_hid, ksz, stride, pad, H, W):
        kparam, kx = jax.random.split(jax.random.PRNGKey(seed))
        model = SoftSplitPallas(C_in, C_hid, ksz, stride, pad, key=kparam)
        x = jax.random.normal(kx, (B, T, C_in, H, W), jnp.float32)
        out = jax.block_until_ready(model(x))
        gh = (H + 2 * pad - ksz) // stride + 1
        gw = (W + 2 * pad - ksz) // stride + 1
        assert out.shape == (B, T, gh, gw, C_hid), out.shape
        ref = reference(x, model.w_emb, model.b_emb, ksz, stride, pad)
        max_err = float(jnp.max(jnp.abs(out - ref)))
        if not bool(jnp.allclose(out, ref, atol=5e-2, rtol=5e-2)):
            raise SystemExit(
                f"Pallas result mismatch vs reference (max abs err {max_err:.3e})")

    # Primary small config (k > s, padding > 0), deterministic via PRNGKey(0).
    run_case(0, B=2, T=2, C_in=4, C_hid=32, ksz=3, stride=2, pad=1, H=16, W=16)
    # Secondary config exercising the k <= s, padding = 0 path flagged in the review.
    run_case(1, B=1, T=2, C_in=2, C_hid=16, ksz=3, stride=3, pad=0, H=12, W=12)

    print("KERNEL_OK")
</pallas_src>

<mosaic_0001>
module attributes {stable_mosaic.version = 11 : i64} {
  func.func @_softsplit_kernel(%arg0: i32, %arg1: memref<1x9x9x16xbf16, #tpu.memory_space<vmem>>, %arg2: memref<2x2x16x128xbf16, #tpu.memory_space<vmem>>, %arg3: memref<1x128xf32, #tpu.memory_space<vmem>>, %arg4: memref<1x8x8x128xf32, #tpu.memory_space<vmem>>) attributes {dimension_semantics = [#tpu.dimension_semantics<parallel>], iteration_bounds = array<i64: 4>, scalar_prefetch = 0 : i64, scratch_operands = 0 : i64, tpu.core_type = #tpu.core_type<tc>, window_params = [{transform_indices = @transform_0, window_bounds = array<i64: 1, 9, 9, 16>}, {pipeline_mode = #tpu.pipeline_mode<synchronous>, transform_indices = @transform_1, window_bounds = array<i64: 2, 2, 16, 128>}, {pipeline_mode = #tpu.pipeline_mode<synchronous>, transform_indices = @transform_2, window_bounds = array<i64: 1, 128>}, {transform_indices = @transform_3, window_bounds = array<i64: 1, 8, 8, 128>}]} {
    %c0 = arith.constant 0 : index
    %c0_0 = arith.constant 0 : index
    %0 = vector.load %arg3[%c0, %c0_0] : memref<1x128xf32, #tpu.memory_space<vmem>>, vector<1x128xf32>
    %1 = vector.shape_cast %0 : vector<1x128xf32> to vector<1x128xf32>
    %2 = vector.broadcast %1 : vector<1x128xf32> to vector<64x128xf32>
    %c0_1 = arith.constant 0 : index
    %c0_2 = arith.constant 0 : index
    %c0_3 = arith.constant 0 : index
    %c0_4 = arith.constant 0 : index
    %3 = vector.load %arg1[%c0_1, %c0_2, %c0_3, %c0_4] : memref<1x9x9x16xbf16, #tpu.memory_space<vmem>>, vector<1x9x8x16xbf16>
    %4 = vector.extract_strided_slice %3 {offsets = [0, 0, 0, 0], sizes = [1, 8, 8, 16], strides = [1, 1, 1, 1]} : vector<1x9x8x16xbf16> to vector<1x8x8x16xbf16>
    %5 = vector.shape_cast %4 : vector<1x8x8x16xbf16> to vector<64x16xbf16>
    %c0_5 = arith.constant 0 : index
    %c0_6 = arith.constant 0 : index
    %c0_7 = arith.constant 0 : index
    %c0_8 = arith.constant 0 : index
    %6 = vector.load %arg2[%c0_5, %c0_6, %c0_7, %c0_8] : memref<2x2x16x128xbf16, #tpu.memory_space<vmem>>, vector<1x1x16x128xbf16>
    %7 = vector.shape_cast %6 : vector<1x1x16x128xbf16> to vector<16x128xbf16>
    %cst = arith.constant dense<0.000000e+00> : vector<64x128xf32>
    %8 = tpu.matmul %5, %7, %cst {dimension_numbers = #tpu.dot_dimension_numbers<[1], [0], [0], [1], [0, 0, 1, 1], [], []>} : vector<64x16xbf16>, vector<16x128xbf16>, vector<64x128xf32> -> vector<64x128xf32>
    %9 = arith.addf %2, %8 : vector<64x128xf32>
    %10 = vector.extract_strided_slice %3 {offsets = [0, 1, 0, 0], sizes = [1, 8, 8, 16], strides = [1, 1, 1, 1]} : vector<1x9x8x16xbf16> to vector<1x8x8x16xbf16>
    %11 = vector.shape_cast %10 : vector<1x8x8x16xbf16> to vector<64x16xbf16>
    %c1 = arith.constant 1 : index
    %c0_9 = arith.constant 0 : index
    %c0_10 = arith.constant 0 : index
    %c0_11 = arith.constant 0 : index
    %12 = vector.load %arg2[%c1, %c0_9, %c0_10, %c0_11] : memref<2x2x16x128xbf16, #tpu.memory_space<vmem>>, vector<1x1x16x128xbf16>
    %13 = vector.shape_cast %12 : vector<1x1x16x128xbf16> to vector<16x128xbf16>
    %cst_12 = arith.constant dense<0.000000e+00> : vector<64x128xf32>
    %14 = tpu.matmul %11, %13, %cst_12 {dimension_numbers = #tpu.dot_dimension_numbers<[1], [0], [0], [1], [0, 0, 1, 1], [], []>} : vector<64x16xbf16>, vector<16x128xbf16>, vector<64x128xf32> -> vector<64x128xf32>
    %15 = arith.addf %9, %14 : vector<64x128xf32>
    %c0_13 = arith.constant 0 : index
    %c0_14 = arith.constant 0 : index
    %c1_15 = arith.constant 1 : index
    %c0_16 = arith.constant 0 : index
    %16 = vector.load %arg1[%c0_13, %c0_14, %c1_15, %c0_16] : memref<1x9x9x16xbf16, #tpu.memory_space<vmem>>, vector<1x9x8x16xbf16>
    %17 = vector.extract_strided_slice %16 {offsets = [0, 0, 0, 0], sizes = [1, 8, 8, 16], strides = [1, 1, 1, 1]} : vector<1x9x8x16xbf16> to vector<1x8x8x16xbf16>
    %18 = vector.shape_cast %17 : vector<1x8x8x16xbf16> to vector<64x16xbf16>
    %c0_17 = arith.constant 0 : index
    %c1_18 = arith.constant 1 : index
    %c0_19 = arith.constant 0 : index
    %c0_20 = arith.constant 0 : index
    %19 = vector.load %arg2[%c0_17, %c1_18, %c0_19, %c0_20] : memref<2x2x16x128xbf16, #tpu.memory_space<vmem>>, vector<1x1x16x128xbf16>
    %20 = vector.shape_cast %19 : vector<1x1x16x128xbf16> to vector<16x128xbf16>
    %cst_21 = arith.constant dense<0.000000e+00> : vector<64x128xf32>
    %21 = tpu.matmul %18, %20, %cst_21 {dimension_numbers = #tpu.dot_dimension_numbers<[1], [0], [0], [1], [0, 0, 1, 1], [], []>} : vector<64x16xbf16>, vector<16x128xbf16>, vector<64x128xf32> -> vector<64x128xf32>
    %22 = arith.addf %15, %21 : vector<64x128xf32>
    %23 = vector.extract_strided_slice %16 {offsets = [0, 1, 0, 0], sizes = [1, 8, 8, 16], strides = [1, 1, 1, 1]} : vector<1x9x8x16xbf16> to vector<1x8x8x16xbf16>
    %24 = vector.shape_cast %23 : vector<1x8x8x16xbf16> to vector<64x16xbf16>
    %c1_22 = arith.constant 1 : index
    %c1_23 = arith.constant 1 : index
    %c0_24 = arith.constant 0 : index
    %c0_25 = arith.constant 0 : index
    %25 = vector.load %arg2[%c1_22, %c1_23, %c0_24, %c0_25] : memref<2x2x16x128xbf16, #tpu.memory_space<vmem>>, vector<1x1x16x128xbf16>
    %26 = vector.shape_cast %25 : vector<1x1x16x128xbf16> to vector<16x128xbf16>
    %cst_26 = arith.constant dense<0.000000e+00> : vector<64x128xf32>
    %27 = tpu.matmul %24, %26, %cst_26 {dimension_numbers = #tpu.dot_dimension_numbers<[1], [0], [0], [1], [0, 0, 1, 1], [], []>} : vector<64x16xbf16>, vector<16x128xbf16>, vector<64x128xf32> -> vector<64x128xf32>
    %28 = arith.addf %22, %27 : vector<64x128xf32>
    %29 = vector.shape_cast %28 : vector<64x128xf32> to vector<1x8x8x128xf32>
    %c0_27 = arith.constant 0 : index
    %c0_28 = arith.constant 0 : index
    %c0_29 = arith.constant 0 : index
    %c0_30 = arith.constant 0 : index
    %30 = vector.load %arg4[%c0_27, %c0_28, %c0_29, %c0_30] : memref<1x8x8x128xf32, #tpu.memory_space<vmem>>, vector<1x8x8x128xf32>
    tpu.vector_store %arg4[%c0_27, %c0_28, %c0_29, %c0_30], %29 {strides = array<i32>} : memref<1x8x8x128xf32, #tpu.memory_space<vmem>>, vector<1x8x8x128xf32>,
    return
  }
  func.func @transform_0(%arg0: i32) -> (i32, i32, i32, i32) {
    %c0_i32 = arith.constant 0 : i32
    %c0_i32_0 = arith.constant 0 : i32
    %c0_i32_1 = arith.constant 0 : i32
    %c0_i32_2 = arith.constant 0 : i32
    return %arg0, %c0_i32, %c0_i32_0, %c0_i32_1 : i32, i32, i32, i32
  }
  func.func @transform_1(%arg0: i32) -> (i32, i32, i32, i32) {
    %c0_i32 = arith.constant 0 : i32
    %c0_i32_0 = arith.constant 0 : i32
    %c0_i32_1 = arith.constant 0 : i32
    %c0_i32_2 = arith.constant 0 : i32
    %c0_i32_3 = arith.constant 0 : i32
    return %c0_i32, %c0_i32_0, %c0_i32_1, %c0_i32_2 : i32, i32, i32, i32
  }
  func.func @transform_2(%arg0: i32) -> (i32, i32) {
    %c0_i32 = arith.constant 0 : i32
    %c0_i32_0 = arith.constant 0 : i32
    %c0_i32_1 = arith.constant 0 : i32
    return %c0_i32, %c0_i32_0 : i32, i32
  }
  func.func @transform_3(%arg0: i32) -> (i32, i32, i32, i32) {
    %c0_i32 = arith.constant 0 : i32
    %c0_i32_0 = arith.constant 0 : i32
    %c0_i32_1 = arith.constant 0 : i32
    %c0_i32_2 = arith.constant 0 : i32
    return %arg0, %c0_i32, %c0_i32_0, %c0_i32_1 : i32, i32, i32, i32
  }
}

module attributes {stable_mosaic.version = 11 : i64} {
  func.func @_softsplit_kernel(%arg0: i32, %arg1: memref<1x9x9x16xbf16, #tpu.memory_space<vmem>>, %arg2: memref<2x2x16x128xbf16, #tpu.memory_space<vmem>>, %arg3: memref<1x128xf32, #tpu.memory_space<vmem>>, %arg4: memref<1x8x8x128xf32, #tpu.memory_space<vmem>>) attributes {dimension_semantics = [#tpu.dimension_semantics<parallel>], iteration_bounds = array<i64: 4>, scalar_prefetch = 0 : i64, scratch_operands = 0 : i64, tpu.core_type = #tpu.core_type<tc>, window_params = [{transform_indices = @transform_0, window_bounds = array<i64: 1, 9, 9, 16>}, {pipeline_mode = #tpu.pipeline_mode<synchronous>, transform_indices = @transform_1, window_bounds = array<i64: 2, 2, 16, 128>}, {pipeline_mode = #tpu.pipeline_mode<synchronous>, transform_indices = @transform_2, window_bounds = array<i64: 1, 128>}, {transform_indices = @transform_3, window_bounds = array<i64: 1, 8, 8, 128>}]} {
    %c0 = arith.constant 0 : index
    %c0_0 = arith.constant 0 : index
    %0 = vector.load %arg3[%c0, %c0_0] : memref<1x128xf32, #tpu.memory_space<vmem>>, vector<1x128xf32>
    %1 = vector.shape_cast %0 : vector<1x128xf32> to vector<1x128xf32>
    %2 = vector.broadcast %1 : vector<1x128xf32> to vector<64x128xf32>
    %c0_1 = arith.constant 0 : index
    %c0_2 = arith.constant 0 : index
    %c0_3 = arith.constant 0 : index
    %c0_4 = arith.constant 0 : index
    %3 = vector.load %arg1[%c0_1, %c0_2, %c0_3, %c0_4] : memref<1x9x9x16xbf16, #tpu.memory_space<vmem>>, vector<1x9x8x16xbf16>
    %4 = vector.extract_strided_slice %3 {offsets = [0, 0, 0, 0], sizes = [1, 8, 8, 16], strides = [1, 1, 1, 1]} : vector<1x9x8x16xbf16> to vector<1x8x8x16xbf16>
    %5 = vector.shape_cast %4 : vector<1x8x8x16xbf16> to vector<64x16xbf16>
    %c0_5 = arith.constant 0 : index
    %c0_6 = arith.constant 0 : index
    %c0_7 = arith.constant 0 : index
    %c0_8 = arith.constant 0 : index
    %6 = vector.load %arg2[%c0_5, %c0_6, %c0_7, %c0_8] : memref<2x2x16x128xbf16, #tpu.memory_space<vmem>>, vector<1x1x16x128xbf16>
    %7 = vector.shape_cast %6 : vector<1x1x16x128xbf16> to vector<16x128xbf16>
    %cst = arith.constant dense<0.000000e+00> : vector<64x128xf32>
    %8 = tpu.matmul %5, %7, %cst {dimension_numbers = #tpu.dot_dimension_numbers<[1], [0], [0], [1], [0, 0, 1, 1], [], []>} : vector<64x16xbf16>, vector<16x128xbf16>, vector<64x128xf32> -> vector<64x128xf32>
    %9 = arith.addf %2, %8 : vector<64x128xf32>
    %10 = vector.extract_strided_slice %3 {offsets = [0, 1, 0, 0], sizes = [1, 8, 8, 16], strides = [1, 1, 1, 1]} : vector<1x9x8x16xbf16> to vector<1x8x8x16xbf16>
    %11 = vector.shape_cast %10 : vector<1x8x8x16xbf16> to vector<64x16xbf16>
    %c1 = arith.constant 1 : index
    %c0_9 = arith.constant 0 : index
    %c0_10 = arith.constant 0 : index
    %c0_11 = arith.constant 0 : index
    %12 = vector.load %arg2[%c1, %c0_9, %c0_10, %c0_11] : memref<2x2x16x128xbf16, #tpu.memory_space<vmem>>, vector<1x1x16x128xbf16>
    %13 = vector.shape_cast %12 : vector<1x1x16x128xbf16> to vector<16x128xbf16>
    %cst_12 = arith.constant dense<0.000000e+00> : vector<64x128xf32>
    %14 = tpu.matmul %11, %13, %cst_12 {dimension_numbers = #tpu.dot_dimension_numbers<[1], [0], [0], [1], [0, 0, 1, 1], [], []>} : vector<64x16xbf16>, vector<16x128xbf16>, vector<64x128xf32> -> vector<64x128xf32>
    %15 = arith.addf %9, %14 : vector<64x128xf32>
    %c0_13 = arith.constant 0 : index
    %c0_14 = arith.constant 0 : index
    %c1_15 = arith.constant 1 : index
    %c0_16 = arith.constant 0 : index
    %16 = vector.load %arg1[%c0_13, %c0_14, %c1_15, %c0_16] : memref<1x9x9x16xbf16, #tpu.memory_space<vmem>>, vector<1x9x8x16xbf16>
    %17 = vector.extract_strided_slice %16 {offsets = [0, 0, 0, 0], sizes = [1, 8, 8, 16], strides = [1, 1, 1, 1]} : vector<1x9x8x16xbf16> to vector<1x8x8x16xbf16>
    %18 = vector.shape_cast %17 : vector<1x8x8x16xbf16> to vector<64x16xbf16>
    %c0_17 = arith.constant 0 : index
    %c1_18 = arith.constant 1 : index
    %c0_19 = arith.constant 0 : index
    %c0_20 = arith.constant 0 : index
    %19 = vector.load %arg2[%c0_17, %c1_18, %c0_19, %c0_20] : memref<2x2x16x128xbf16, #tpu.memory_space<vmem>>, vector<1x1x16x128xbf16>
    %20 = vector.shape_cast %19 : vector<1x1x16x128xbf16> to vector<16x128xbf16>
    %cst_21 = arith.constant dense<0.000000e+00> : vector<64x128xf32>
    %21 = tpu.matmul %18, %20, %cst_21 {dimension_numbers = #tpu.dot_dimension_numbers<[1], [0], [0], [1], [0, 0, 1, 1], [], []>} : vector<64x16xbf16>, vector<16x128xbf16>, vector<64x128xf32> -> vector<64x128xf32>
    %22 = arith.addf %15, %21 : vector<64x128xf32>
    %23 = vector.extract_strided_slice %16 {offsets = [0, 1, 0, 0], sizes = [1, 8, 8, 16], strides = [1, 1, 1, 1]} : vector<1x9x8x16xbf16> to vector<1x8x8x16xbf16>
    %24 = vector.shape_cast %23 : vector<1x8x8x16xbf16> to vector<64x16xbf16>
    %c1_22 = arith.constant 1 : index
    %c1_23 = arith.constant 1 : index
    %c0_24 = arith.constant 0 : index
    %c0_25 = arith.constant 0 : index
    %25 = vector.load %arg2[%c1_22, %c1_23, %c0_24, %c0_25] : memref<2x2x16x128xbf16, #tpu.memory_space<vmem>>, vector<1x1x16x128xbf16>
    %26 = vector.shape_cast %25 : vector<1x1x16x128xbf16> to vector<16x128xbf16>
    %cst_26 = arith.constant dense<0.000000e+00> : vector<64x128xf32>
    %27 = tpu.matmul %24, %26, %cst_26 {dimension_numbers = #tpu.dot_dimension_numbers<[1], [0], [0], [1], [0, 0, 1, 1], [], []>} : vector<64x16xbf16>, vector<16x128xbf16>, vector<64x128xf32> -> vector<64x128xf32>
    %28 = arith.addf %22, %27 : vector<64x128xf32>
    %29 = vector.shape_cast %28 : vector<64x128xf32> to vector<1x8x8x128xf32>
    %c0_27 = arith.constant 0 : index
    %c0_28 = arith.constant 0 : index
    %c0_29 = arith.constant 0 : index
    %c0_30 = arith.constant 0 : index
    %30 = vector.load %arg4[%c0_27, %c0_28, %c0_29, %c0_30] : memref<1x8x8x128xf32, #tpu.memory_space<vmem>>, vector<1x8x8x128xf32>
    tpu.vector_store %arg4[%c0_27, %c0_28, %c0_29, %c0_30], %29 {strides = array<i32>} : memref<1x8x8x128xf32, #tpu.memory_space<vmem>>, vector<1x8x8x128xf32>,
    return
  }
  func.func @transform_0(%arg0: i32) -> (i32, i32, i32, i32) {
    %c0_i32 = arith.constant 0 : i32
    %c0_i32_0 = arith.constant 0 : i32
    %c0_i32_1 = arith.constant 0 : i32
    %c0_i32_2 = arith.constant 0 : i32
    return %arg0, %c0_i32, %c0_i32_0, %c0_i32_1 : i32, i32, i32, i32
  }
  func.func @transform_1(%arg0: i32) -> (i32, i32, i32, i32) {
    %c0_i32 = arith.constant 0 : i32
    %c0_i32_0 = arith.constant 0 : i32
    %c0_i32_1 = arith.constant 0 : i32
    %c0_i32_2 = arith.constant 0 : i32
    %c0_i32_3 = arith.constant 0 : i32
    return %c0_i32, %c0_i32_0, %c0_i32_1, %c0_i32_2 : i32, i32, i32, i32
  }
  func.func @transform_2(%arg0: i32) -> (i32, i32) {
    %c0_i32 = arith.constant 0 : i32
    %c0_i32_0 = arith.constant 0 : i32
    %c0_i32_1 = arith.constant 0 : i32
    return %c0_i32, %c0_i32_0 : i32, i32
  }
  func.func @transform_3(%arg0: i32) -> (i32, i32, i32, i32) {
    %c0_i32 = arith.constant 0 : i32
    %c0_i32_0 = arith.constant 0 : i32
    %c0_i32_1 = arith.constant 0 : i32
    %c0_i32_2 = arith.constant 0 : i32
    return %arg0, %c0_i32, %c0_i32_0, %c0_i32_1 : i32, i32, i32, i32
  }
}

</mosaic_0001>

<llo_original>
// kernel: tpu_custom_call.1
$region0: #{tpu_custom_call.1}
  #allocation0 [shape = 'u32[]', space=smem, size = 0x4, offset = 0x4, fixed_abs, tag = 'smem constant byte address 0x4 - core index']
  #allocation1 [shape = 'u32[144,128]{1,0:T(1,128)}', space=vmem, size = 0x12000, scoped, tag = 'internal scratch']
  %s0 = inlined_call_operand.vmem [shape: bf16[4,9,9,16], index: 0, kind: input, shape index: {}]
  %s1 = inlined_call_operand.vmem [shape: bf16[2,2,16,128], index: 1, kind: input, shape index: {}]
  %s2 = inlined_call_operand.vmem [shape: f32[1,128], index: 2, kind: input, shape index: {}]
  %s3 = inlined_call_operand.hbm [shape: f32[4,8,8,128], index: 3, kind: output, shape index: {}]
  %s4 = sld [smem:[#allocation0]]
  $region45: #{tpu_custom_call.1} parent=0
    _
  %s6 = ssub.s32 1, %s4
  %s7 = scalar_select 0, %s6, %s4
  $region1: #{tpu_custom_call.1} parent=0
    #allocation2 [shape = 'u8[65536]{0}', space=vmem, size = 0x10000, scoped, tag = 'output window, operand 0']
    #allocation3 [shape = 's32[2]{0}', space=sflag, size = 0x8, scoped, tag = 'scoped memory for tpu_custom_call.1']
    %8 = vsyncpa [#allocation3], 0
    %s9 = scalar_lea.sflag [#allocation3], 1
    %10 = vsyncpa %s9, 0
    loop: start=0, step=1, limit=6
    $region2: #{tpu_custom_call.1} parent=1 // loop_pre_header
      _
    $region3: #{tpu_custom_call.1} parent=1 // loop_header
      %s12 = sphi 0, %s16
      %p13 = scmp.ge.s32.totalorder %s12, 6
      %s22 = sphi 0, %s24
      %s25 = sphi 0, %s22
      %s26 = sphi 0, %s25
      %s42 = sphi 0, %s26
      %s46 = sphi 0, %s46
      %s48 = sphi 0, %s46
      %s49 = sphi 0, %s48
      %s63 = sphi 0, %s49
      %s67 = sphi 0, %s67
      %s69 = sphi 0, %s67
      %s70 = sphi 0, %s69
      %s84 = sphi 0, %s70
      %s90 = sphi 0, %s92
      %s93 = sphi 0, %s90
      %s94 = sphi 0, %s93
      %s110 = sphi 0, %s94
    $region4: #{tpu_custom_call.1} parent=1 // loop_header_branch
      %15 = sbr.rel (%p13) target = $region8
    $region5: #{tpu_custom_call.1} parent=1 // loop_body
      %s17 = ssub.s32 %s12, 1
      %s18 = ssub.s32 %s12, 2
      %s19 = sadd.s32 %s12, 1
      %s20 = ssub.s32 %s12, %s19
      %p21 = scmp.eq.s32.totalorder %s20, 0
      %s23 = sadd.s32 %s22, 1
      %s24 = scalar_select %p21, %s22, %s23
      %p27 = pneg %p21
      %p28 = scmp.eq.s32.totalorder %s12, 3
      %p29 = por %p27, %p28
      %p30 = scmp.ne.s32.totalorder %s22, %s25
      %p31 = scmp.eq.s32.totalorder %s12, 0
      %p32 = por %p30, %p31
      %p33 = scmp.ne.s32.totalorder %s22, %s25
      %p34 = scmp.eq.s32.totalorder %s17, 3
      %p35 = por %p33, %p34
      %p36 = scmp.ne.s32.totalorder %s25, %s26
      %p37 = scmp.eq.s32.totalorder %s17, 0
      %p38 = por %p36, %p37
      %p39 = scmp.ne.s32.totalorder %s25, %s26
      %p40 = scmp.eq.s32.totalorder %s18, 3
      %p41 = por %p39, %p40
      %p43 = scmp.ne.s32.totalorder %s26, %s42
      %p44 = scmp.eq.s32.totalorder %s18, 0
      %p45 = por %p43, %p44
      %s47 = sadd.s32 %s46, 1
      %p50 = scmp.eq.s32.totalorder %s12, 3
      %p51 = scmp.ne.s32.totalorder %s46, %s48
      %p52 = scmp.eq.s32.totalorder %s12, 0
      %p53 = por %p51, %p52
      %p54 = scmp.ne.s32.totalorder %s46, %s48
      %p55 = scmp.eq.s32.totalorder %s17, 3
      %p56 = por %p54, %p55
      %p57 = scmp.ne.s32.totalorder %s48, %s49
      %p58 = scmp.eq.s32.totalorder %s17, 0
      %p59 = por %p57, %p58
      %p60 = scmp.ne.s32.totalorder %s48, %s49
      %p61 = scmp.eq.s32.totalorder %s18, 3
      %p62 = por %p60, %p61
      %p64 = scmp.ne.s32.totalorder %s49, %s63
      %p65 = scmp.eq.s32.totalorder %s18, 0
      %p66 = por %p64, %p65
      %s68 = sadd.s32 %s67, 1
      %p71 = scmp.eq.s32.totalorder %s12, 3
      %p72 = scmp.ne.s32.totalorder %s67, %s69
      %p73 = scmp.eq.s32.totalorder %s12, 0
      %p74 = por %p72, %p73
      %p75 = scmp.ne.s32.totalorder %s67, %s69
      %p76 = scmp.eq.s32.totalorder %s17, 3
      %p77 = por %p75, %p76
      %p78 = scmp.ne.s32.totalorder %s69, %s70
      %p79 = scmp.eq.s32.totalorder %s17, 0
      %p80 = por %p78, %p79
      %p81 = scmp.ne.s32.totalorder %s69, %s70
      %p82 = scmp.eq.s32.totalorder %s18, 3
      %p83 = por %p81, %p82
      %p85 = scmp.ne.s32.totalorder %s70, %s84
      %p86 = scmp.eq.s32.totalorder %s18, 0
      %p87 = por %p85, %p86
      %s88 = ssub.s32 %s12, %s19
      %p89 = scmp.eq.s32.totalorder %s88, 0
      %s91 = sadd.s32 %s90, 1
      %s92 = scalar_select %p89, %s90, %s91
      %p95 = pneg %p89
      %p96 = scmp.eq.s32.totalorder %s12, 3
      %p97 = por %p95, %p96
      %p98 = scmp.ne.s32.totalorder %s90, %s93
      %p99 = scmp.eq.s32.totalorder %s12, 0
      %p100 = por %p98, %p99
      %p101 = scmp.ne.s32.totalorder %s90, %s93
      %p102 = scmp.eq.s32.totalorder %s17, 3
      %p103 = por %p101, %p102
      %p104 = scmp.ne.s32.totalorder %s93, %s94
      %p105 = scmp.eq.s32.totalorder %s17, 0
      %p106 = por %p104, %p105
      %p107 = scmp.ne.s32.totalorder %s93, %s94
      %p108 = scmp.eq.s32.totalorder %s18, 3
      %p109 = por %p107, %p108
      %p111 = scmp.ne.s32.totalorder %s94, %s110
      %p112 = scmp.eq.s32.totalorder %s18, 0
      %p113 = por %p111, %p112
      %p114 = scmp.le.s32.totalorder 1, %s12
      %p115 = scmp.lt.s32.totalorder %s12, 5
      %p116 = pnand %p114, %p115
      %p117 = pneg %p116
      // Predicated region
      $region9: #{tpu_custom_call.1} parent=5 // pred_check
        _
      $region10: #{tpu_custom_call.1} parent=5 // pred_check_branch
        %119 = sbr.rel (%p116) target = $region12
      $region11: #{tpu_custom_call.1} parent=5 // pred_region
        %s120 = ssub.s32 %s12, 1
        // Predicated region
        $region13: #{tpu_custom_call.1} parent=11 // pred_check
          %p121 = pneg %p59
        $region14: #{tpu_custom_call.1} parent=11 // pred_check_branch
          %123 = sbr.rel (%p121) target = $region16
        $region15: #{tpu_custom_call.1} parent=11 // pred_region
          _
        $region16: #{tpu_custom_call.1} parent=11 // pred_fallthru
          _
        // Predicated region
        $region17: #{tpu_custom_call.1} parent=11 // pred_check
          %p124 = pneg %p80
        $region18: #{tpu_custom_call.1} parent=11 // pred_check_branch
          %126 = sbr.rel (%p124) target = $region20
        $region19: #{tpu_custom_call.1} parent=11 // pred_region
          _
        $region20: #{tpu_custom_call.1} parent=11 // pred_fallthru
          _
      $region12: #{tpu_custom_call.1} parent=5 // pred_fallthru
        _
      %p127 = scmp.lt.s32.totalorder %s12, 4
      // Predicated region
      $region21: #{tpu_custom_call.1} parent=5 // pred_check
        %p128 = pneg %p127
      $region22: #{tpu_custom_call.1} parent=5 // pred_check_branch
        %130 = sbr.rel (%p128) target = $region24
      $region23: #{tpu_custom_call.1} parent=5 // pred_region
        // Predicated region
        $region25: #{tpu_custom_call.1} parent=23 // pred_check
          %p131 = pneg %p32
        $region26: #{tpu_custom_call.1} parent=23 // pred_check_branch
          %133 = sbr.rel (%p131) target = $region28
        $region27: #{tpu_custom_call.1} parent=23 // pred_region
          %p134 = scmp.lt.s32.totalorder %s12, 3
          %s135 = scalar_select %p134, %s12, 3
          %s136 = smul.addr %s135, 18
          %s137 = smul.addr %s136, 4
          %s138 = scalar_lea.vmem %s0, %s137
        $region28: #{tpu_custom_call.1} parent=23 // pred_fallthru
          _
      $region24: #{tpu_custom_call.1} parent=5 // pred_fallthru
        _
      %p139 = scmp.le.s32.totalorder 1, %s12
      %p140 = scmp.lt.s32.totalorder %s12, 5
      %p141 = pnand %p139, %p140
      %p142 = pneg %p141
      // Predicated region
      $region29: #{tpu_custom_call.1} parent=5 // pred_check
        _
      $region30: #{tpu_custom_call.1} parent=5 // pred_check_branch
        %144 = sbr.rel (%p141) target = $region32
      $region31: #{tpu_custom_call.1} parent=5 // pred_region
        %s145 = ssub.s32 %s12, 1
        %p146 = scmp.lt.s32.totalorder %s17, 3
        %s147 = scalar_select %p146, %s17, 3
        %s148 = smul.addr %s147, 18
        %s149 = smul.addr %s148, 4
        %s150 = scalar_lea.vmem %s0, %s149
        %p151 = pneg %p38
        %p152 = pneg %p35
        %p153 = pneg %p59
        %p154 = pneg %p56
        %p155 = pneg %p80
        %p156 = pneg %p77
        %p157 = pneg %p106
        %p158 = pneg %p103
        %s159 = sand.u32 %s93, 1
        %s160 = scalar_lea.sflag [#allocation3], %s159
        %s161 = sand.u32 %s93, 1
        %s162 = smul.addr %s161, 64
        %s163 = scalar_lea.vmem [#allocation2], %s162
        %p164 = scmp.lt.s32.totalorder %s17, 3
        %s165 = scalar_select %p164, %s17, 3
        %s166 = smul.addr %s165, 18
        %s167 = smul.addr %s166, 4
        %s168 = scalar_lea.vmem %s0, %s167
        %v170 = vld [vmem:[%s2] sm:$0x1]
        %v172 = vlaneseq
        %v173 = vshrl.u32 %v172, 7
        %v174 = vsub.s32 0, %v173
        %v175 = vrot.slane %v170, %v174
        %v177 = vld [vmem:[%s168] sm:$0xf]
        %v178 = vld [vmem:[%s168 + $0x8] sm:$0xf]
        %v179 = vld [vmem:[%s168 + $0x10] sm:$0xf]
        %v180 = vld [vmem:[%s168 + $0x18] sm:$0xf]
        %v181 = vld [vmem:[%s168 + $0x20] sm:$0xf]
        %v182 = vld [vmem:[%s168 + $0x28] sm:$0xf]
        %v183 = vld [vmem:[%s168 + $0x30] sm:$0xf]
        %v184 = vld [vmem:[%s168 + $0x38] sm:$0xf]
        %v185 = vld [vmem:[%s168 + $0x40] sm:$0xf]
        %v186 = vld [vmem:[%s1] sm:$0xf]
        %v187 = vld [vmem:[%s1 + $0x4] sm:$0xf]
        %v196 = vunpack.c.l.b16 %v177
        %v197 = vunpack.c.l.b16 %v178
        %v198 = vunpack.c.l.b16 %v179
        %v199 = vunpack.c.l.b16 %v180
        %v200 = vunpack.c.l.b16 %v181
        %v201 = vunpack.c.l.b16 %v182
        %v202 = vunpack.c.l.b16 %v183
        %v203 = vunpack.c.l.b16 %v184
        %v204 = vpack.c.b16 %v197, %v196
        %v205 = vpack.c.b16 %v199, %v198
        %v206 = vpack.c.b16 %v201, %v200
        %v207 = vpack.c.b16 %v203, %v202
        %v210 = vunpack.c.l.b16 %v186
        %v211 = vunpack.c.l.b16 %v187
        %v212 = vpack.c.b16 %v211, %v210
        %vm214 = vcmask 130048
        %v216 = vsel %vm214, %v204, 0
        %v219 = vsel %vm214, %v205, 0
        %v222 = vsel %vm214, %v206, 0
        %v225 = vsel %vm214, %v207, 0
        %227 = vmatprep.subr.bf16.mxu0 0
        %228 = vmatpush1.bf16.msra.mxu0 0
        %229 = vmatprep.subr.bf16.mxu0 0
        %230 = vmatpush1.bf16.msra.mxu0 0
        %231 = vmatprep.subr.bf16.mxu0 0
        %232 = vmatpush1.bf16.msra.mxu0 0
        %233 = vmatprep.subr.bf16.mxu0 0
        %234 = vmatpush1.bf16.msra.mxu0 0
        %235 = vmatprep.subr.bf16.mxu0 0
        %236 = vmatpush1.bf16.msra.mxu0 0
        %237 = vmatprep.subr.bf16.mxu0 0
        %238 = vmatpush1.bf16.msra.mxu0 0
        %239 = vmatprep.subr.bf16.mxu0 0
        %240 = vmatpush1.bf16.msra.mxu0 0
        %241 = vmatprep.subr.bf16.mxu0 0
        %242 = vmatpush1.bf16.msra.mxu0 %v212
        %243 = vmatprep.subr.bf16.mxu0 0
        %244 = vmatpush2.bf16.msra.mxu0 0
        %245 = vmatprep.subr.bf16.mxu0 0
        %246 = vmatpush2.bf16.msra.mxu0 0
        %247 = vmatprep.subr.bf16.mxu0 0
        %248 = vmatpush2.bf16.msra.mxu0 0
        %249 = vmatprep.subr.bf16.mxu0 0
        %250 = vmatpush2.bf16.msra.mxu0 0
        %251 = vmatprep.subr.bf16.mxu0 0
        %252 = vmatpush2.bf16.msra.mxu0 0
        %253 = vmatprep.subr.bf16.mxu0 0
        %254 = vmatpush2.bf16.msra.mxu0 0
        %255 = vmatprep.subr.bf16.mxu0 0
        %256 = vmatpush2.bf16.msra.mxu0 0
        %257 = vmatprep.subr.bf16.mxu0 0
        %258 = vmatpush2.bf16.msra.mxu0 0
        %259 = vmatprep.mubr.bf16.mxu0 0
        %260 = vmatmul.mubr.bf16.gmra.mxu0 %v216
        %v261 = vpop.f32.mrf.mxu0
        %v262 = vadd.f32 0.0, %v261
        %v263 = vpop.f32.mrf.mxu0
        %v264 = vpop.f32.mrf.mxu0
        %v265 = vadd.f32 0.0, %v264
        %v266 = vpop.f32.mrf.mxu0
        %267 = vmatprep.mubr.bf16.mxu0 0
        %268 = vmatmul.mubr.bf16.gmra.mxu0 %v219
        %v269 = vpop.f32.mrf.mxu0
        %v270 = vadd.f32 0.0, %v269
        %v271 = vpop.f32.mrf.mxu0
        %v272 = vpop.f32.mrf.mxu0
        %v273 = vadd.f32 0.0, %v272
        %v274 = vpop.f32.mrf.mxu0
        %275 = vmatprep.mubr.bf16.mxu0 0
        %276 = vmatmul.mubr.bf16.gmra.mxu0 %v222
        %v277 = vpop.f32.mrf.mxu0
        %v278 = vadd.f32 0.0, %v277
        %v279 = vpop.f32.mrf.mxu0
        %v280 = vpop.f32.mrf.mxu0
        %v281 = vadd.f32 0.0, %v280
        %v282 = vpop.f32.mrf.mxu0
        %283 = vmatprep.mubr.bf16.mxu0 0
        %284 = vmatmul.mubr.bf16.gmra.mxu0 %v225
        %v285 = vpop.f32.mrf.mxu0
        %v286 = vadd.f32 0.0, %v285
        %v287 = vpop.f32.mrf.mxu0
        %v288 = vpop.f32.mrf.mxu0
        %v289 = vadd.f32 0.0, %v288
        %v290 = vpop.f32.mrf.mxu0
        %291 = vdwg.mxu0
        %v292 = vadd.f32 %v175, %v262
        %v293 = vadd.f32 %v175, %v265
        %v294 = vadd.f32 %v175, %v270
        %v295 = vadd.f32 %v175, %v273
        %v296 = vadd.f32 %v175, %v278
        %v297 = vadd.f32 %v175, %v281
        %v298 = vadd.f32 %v175, %v286
        %v299 = vadd.f32 %v175, %v289
        %s300 = scalar_lea.vmem %s1, 16
        %v301 = vld [vmem:[%s300] sm:$0xf]
        %v302 = vld [vmem:[%s300 + $0x4] sm:$0xf]
        %v304 = vunpack.c.l.b16 %v185
        %v305 = vpack.c.b16 %v198, %v197
        %v306 = vpack.c.b16 %v200, %v199
        %v307 = vpack.c.b16 %v202, %v201
        %v308 = vpack.c.b16 %v304, %v203
        %v311 = vunpack.c.l.b16 %v301
        %v312 = vunpack.c.l.b16 %v302
        %v313 = vpack.c.b16 %v312, %v311
        %v316 = vsel %vm214, %v305, 0
        %v319 = vsel %vm214, %v306, 0
        %v322 = vsel %vm214, %v307, 0
        %v325 = vsel %vm214, %v308, 0
        %327 = vmatprep.subr.bf16.mxu0 0
        %328 = vmatpush1.bf16.msra.mxu0 0
        %329 = vmatprep.subr.bf16.mxu0 0
        %330 = vmatpush1.bf16.msra.mxu0 0
        %331 = vmatprep.subr.bf16.mxu0 0
        %332 = vmatpush1.bf16.msra.mxu0 0
        %333 = vmatprep.subr.bf16.mxu0 0
        %334 = vmatpush1.bf16.msra.mxu0 0
        %335 = vmatprep.subr.bf16.mxu0 0
        %336 = vmatpush1.bf16.msra.mxu0 0
        %337 = vmatprep.subr.bf16.mxu0 0
        %338 = vmatpush1.bf16.msra.mxu0 0
        %339 = vmatprep.subr.bf16.mxu0 0
        %340 = vmatpush1.bf16.msra.mxu0 0
        %341 = vmatprep.subr.bf16.mxu0 0
        %342 = vmatpush1.bf16.msra.mxu0 %v313
        %343 = vmatprep.subr.bf16.mxu0 0
        %344 = vmatpush2.bf16.msra.mxu0 0
        %345 = vmatprep.subr.bf16.mxu0 0
        %346 = vmatpush2.bf16.msra.mxu0 0
        %347 = vmatprep.subr.bf16.mxu0 0
        %348 = vmatpush2.bf16.msra.mxu0 0
        %349 = vmatprep.subr.bf16.mxu0 0
        %350 = vmatpush2.bf16.msra.mxu0 0
        %351 = vmatprep.subr.bf16.mxu0 0
        %352 = vmatpush2.bf16.msra.mxu0 0
        %353 = vmatprep.subr.bf16.mxu0 0
        %354 = vmatpush2.bf16.msra.mxu0 0
        %355 = vmatprep.subr.bf16.mxu0 0
        %356 = vmatpush2.bf16.msra.mxu0 0
        %357 = vmatprep.subr.bf16.mxu0 0
        %358 = vmatpush2.bf16.msra.mxu0 0
        %359 = vmatprep.mubr.bf16.mxu0 0
        %360 = vmatmul.mubr.bf16.gmra.mxu0 %v316
        %v361 = vpop.f32.mrf.mxu0
        %v362 = vadd.f32 0.0, %v361
        %v363 = vpop.f32.mrf.mxu0
        %v364 = vpop.f32.mrf.mxu0
        %v365 = vadd.f32 0.0, %v364
        %v366 = vpop.f32.mrf.mxu0
        %367 = vmatprep.mubr.bf16.mxu0 0
        %368 = vmatmul.mubr.bf16.gmra.mxu0 %v319
        %v369 = vpop.f32.mrf.mxu0
        %v370 = vadd.f32 0.0, %v369
        %v371 = vpop.f32.mrf.mxu0
        %v372 = vpop.f32.mrf.mxu0
        %v373 = vadd.f32 0.0, %v372
        %v374 = vpop.f32.mrf.mxu0
        %375 = vmatprep.mubr.bf16.mxu0 0
        %376 = vmatmul.mubr.bf16.gmra.mxu0 %v322
        %v377 = vpop.f32.mrf.mxu0
        %v378 = vadd.f32 0.0, %v377
        %v379 = vpop.f32.mrf.mxu0
        %v380 = vpop.f32.mrf.mxu0
        %v381 = vadd.f32 0.0, %v380
        %v382 = vpop.f32.mrf.mxu0
        %383 = vmatprep.mubr.bf16.mxu0 0
        %384 = vmatmul.mubr.bf16.gmra.mxu0 %v325
        %v385 = vpop.f32.mrf.mxu0
        %v386 = vadd.f32 0.0, %v385
        %v387 = vpop.f32.mrf.mxu0
        %v388 = vpop.f32.mrf.mxu0
        %v389 = vadd.f32 0.0, %v388
        %v390 = vpop.f32.mrf.mxu0
        %391 = vdwg.mxu0
        %v392 = vadd.f32 %v292, %v362
        %v393 = vadd.f32 %v293, %v365
        %v394 = vadd.f32 %v294, %v370
        %v395 = vadd.f32 %v295, %v373
        %v396 = vadd.f32 %v296, %v378
        %v397 = vadd.f32 %v297, %v381
        %v398 = vadd.f32 %v298, %v386
        %v399 = vadd.f32 %v299, %v389
        %v400 = vld [vmem:[%s168] sm:$0xf]
        %v401 = vld [vmem:[%s168 + $0x4] sm:$0x1]
        %v402 = vld [vmem:[%s168 + $0x8] sm:$0xf]
        %v403 = vld [vmem:[%s168 + $0xc] sm:$0x1]
        %v404 = vld [vmem:[%s168 + $0x10] sm:$0xf]
        %v405 = vld [vmem:[%s168 + $0x14] sm:$0x1]
        %v406 = vld [vmem:[%s168 + $0x18] sm:$0xf]
        %v407 = vld [vmem:[%s168 + $0x1c] sm:$0x1]
        %v408 = vld [vmem:[%s168 + $0x20] sm:$0xf]
        %v409 = vld [vmem:[%s168 + $0x24] sm:$0x1]
        %v410 = vld [vmem:[%s168 + $0x28] sm:$0xf]
        %v411 = vld [vmem:[%s168 + $0x2c] sm:$0x1]
        %v412 = vld [vmem:[%s168 + $0x30] sm:$0xf]
        %v413 = vld [vmem:[%s168 + $0x34] sm:$0x1]
        %v414 = vld [vmem:[%s168 + $0x38] sm:$0xf]
        %v415 = vld [vmem:[%s168 + $0x3c] sm:$0x1]
        %v416 = vld [vmem:[%s168 + $0x40] sm:$0xf]
        %v417 = vld [vmem:[%s168 + $0x44] sm:$0x1]
        %vm418 = vsmask.f32 3328
        %vm419 = vsmask.f32 7440
        %vm420 = vmor %vm418, %vm419
        %v422 = vshrl.u32 %v400, 16
        %v424 = vrot.slane %v422, 4
        %v425 = vshll.u32 %v400, 16
        %v427 = vrot.slane %v425, 5
        %v428 = vor.u32 %v424, %v427
        %v429 = vrot.slane %v428, 4
        %v431 = vshll.u32 %v401, 16
        %v433 = vrot.slane %v431, 5
        %v434 = vsel %vm420, %v429, %v433
        %v436 = vshrl.u32 %v402, 16
        %v438 = vrot.slane %v436, 4
        %v439 = vshll.u32 %v402, 16
        %v441 = vrot.slane %v439, 5
        %v442 = vor.u32 %v438, %v441
        %v443 = vrot.slane %v442, 4
        %v445 = vshll.u32 %v403, 16
        %v447 = vrot.slane %v445, 5
        %v448 = vsel %vm420, %v443, %v447
        %v450 = vshrl.u32 %v404, 16
        %v452 = vrot.slane %v450, 4
        %v453 = vshll.u32 %v404, 16
        %v455 = vrot.slane %v453, 5
        %v456 = vor.u32 %v452, %v455
        %v457 = vrot.slane %v456, 4
        %v459 = vshll.u32 %v405, 16
        %v461 = vrot.slane %v459, 5
        %v462 = vsel %vm420, %v457, %v461
        %v464 = vshrl.u32 %v406, 16
        %v466 = vrot.slane %v464, 4
        %v467 = vshll.u32 %v406, 16
        %v469 = vrot.slane %v467, 5
        %v470 = vor.u32 %v466, %v469
        %v471 = vrot.slane %v470, 4
        %v473 = vshll.u32 %v407, 16
        %v475 = vrot.slane %v473, 5
        %v476 = vsel %vm420, %v471, %v475
        %v478 = vshrl.u32 %v408, 16
        %v480 = vrot.slane %v478, 4
        %v481 = vshll.u32 %v408, 16
        %v483 = vrot.slane %v481, 5
        %v484 = vor.u32 %v480, %v483
        %v485 = vrot.slane %v484, 4
        %v487 = vshll.u32 %v409, 16
        %v489 = vrot.slane %v487, 5
        %v490 = vsel %vm420, %v485, %v489
        %v492 = vshrl.u32 %v410, 16
        %v494 = vrot.slane %v492, 4
        %v495 = vshll.u32 %v410, 16
        %v497 = vrot.slane %v495, 5
        %v498 = vor.u32 %v494, %v497
        %v499 = vrot.slane %v498, 4
        %v501 = vshll.u32 %v411, 16
        %v503 = vrot.slane %v501, 5
        %v504 = vsel %vm420, %v499, %v503
        %v506 = vshrl.u32 %v412, 16
        %v508 = vrot.slane %v506, 4
        %v509 = vshll.u32 %v412, 16
        %v511 = vrot.slane %v509, 5
        %v512 = vor.u32 %v508, %v511
        %v513 = vrot.slane %v512, 4
        %v515 = vshll.u32 %v413, 16
        %v517 = vrot.slane %v515, 5
        %v518 = vsel %vm420, %v513, %v517
        %v520 = vshrl.u32 %v414, 16
        %v522 = vrot.slane %v520, 4
        %v523 = vshll.u32 %v414, 16
        %v525 = vrot.slane %v523, 5
        %v526 = vor.u32 %v522, %v525
        %v527 = vrot.slane %v526, 4
        %v529 = vshll.u32 %v415, 16
        %v531 = vrot.slane %v529, 5
        %v532 = vsel %vm420, %v527, %v531
        %s533 = scalar_lea.vmem %s1, 8
        %v534 = vld [vmem:[%s533] sm:$0xf]
        %v535 = vld [vmem:[%s533 + $0x4] sm:$0xf]
        %v536 = vunpack.c.l.b16 %v434
        %v537 = vunpack.c.l.b16 %v448
        %v538 = vunpack.c.l.b16 %v462
        %v539 = vunpack.c.l.b16 %v476
        %v540 = vunpack.c.l.b16 %v490
        %v541 = vunpack.c.l.b16 %v504
        %v542 = vunpack.c.l.b16 %v518
        %v543 = vunpack.c.l.b16 %v532
        %v544 = vpack.c.b16 %v537, %v536
        %v545 = vpack.c.b16 %v539, %v538
        %v546 = vpack.c.b16 %v541, %v540
        %v547 = vpack.c.b16 %v543, %v542
        %v550 = vunpack.c.l.b16 %v534
        %v551 = vunpack.c.l.b16 %v535
        %v552 = vpack.c.b16 %v551, %v550
        %v555 = vsel %vm214, %v544, 0
        %v558 = vsel %vm214, %v545, 0
        %v561 = vsel %vm214, %v546, 0
        %v564 = vsel %vm214, %v547, 0
        %566 = vmatprep.subr.bf16.mxu0 0
        %567 = vmatpush1.bf16.msra.mxu0 0
        %568 = vmatprep.subr.bf16.mxu0 0
        %569 = vmatpush1.bf16.msra.mxu0 0
        %570 = vmatprep.subr.bf16.mxu0 0
        %571 = vmatpush1.bf16.msra.mxu0 0
        %572 = vmatprep.subr.bf16.mxu0 0
        %573 = vmatpush1.bf16.msra.mxu0 0
        %574 = vmatprep.subr.bf16.mxu0 0
        %575 = vmatpush1.bf16.msra.mxu0 0
        %576 = vmatprep.subr.bf16.mxu0 0
        %577 = vmatpush1.bf16.msra.mxu0 0
        %578 = vmatprep.subr.bf16.mxu0 0
        %579 = vmatpush1.bf16.msra.mxu0 0
        %580 = vmatprep.subr.bf16.mxu0 0
        %581 = vmatpush1.bf16.msra.mxu0 %v552
        %582 = vmatprep.subr.bf16.mxu0 0
        %583 = vmatpush2.bf16.msra.mxu0 0
        %584 = vmatprep.subr.bf16.mxu0 0
        %585 = vmatpush2.bf16.msra.mxu0 0
        %586 = vmatprep.subr.bf16.mxu0 0
        %587 = vmatpush2.bf16.msra.mxu0 0
        %588 = vmatprep.subr.bf16.mxu0 0
        %589 = vmatpush2.bf16.msra.mxu0 0
        %590 = vmatprep.subr.bf16.mxu0 0
        %591 = vmatpush2.bf16.msra.mxu0 0
        %592 = vmatprep.subr.bf16.mxu0 0
        %593 = vmatpush2.bf16.msra.mxu0 0
        %594 = vmatprep.subr.bf16.mxu0 0
        %595 = vmatpush2.bf16.msra.mxu0 0
        %596 = vmatprep.subr.bf16.mxu0 0
        %597 = vmatpush2.bf16.msra.mxu0 0
        %598 = vmatprep.mubr.bf16.mxu0 0
        %599 = vmatmul.mubr.bf16.gmra.mxu0 %v555
        %v600 = vpop.f32.mrf.mxu0
        %v601 = vadd.f32 0.0, %v600
        %v602 = vpop.f32.mrf.mxu0
        %v603 = vpop.f32.mrf.mxu0
        %v604 = vadd.f32 0.0, %v603
        %v605 = vpop.f32.mrf.mxu0
        %606 = vmatprep.mubr.bf16.mxu0 0
        %607 = vmatmul.mubr.bf16.gmra.mxu0 %v558
        %v608 = vpop.f32.mrf.mxu0
        %v609 = vadd.f32 0.0, %v608
        %v610 = vpop.f32.mrf.mxu0
        %v611 = vpop.f32.mrf.mxu0
        %v612 = vadd.f32 0.0, %v611
        %v613 = vpop.f32.mrf.mxu0
        %614 = vmatprep.mubr.bf16.mxu0 0
        %615 = vmatmul.mubr.bf16.gmra.mxu0 %v561
        %v616 = vpop.f32.mrf.mxu0
        %v617 = vadd.f32 0.0, %v616
        %v618 = vpop.f32.mrf.mxu0
        %v619 = vpop.f32.mrf.mxu0
        %v620 = vadd.f32 0.0, %v619
        %v621 = vpop.f32.mrf.mxu0
        %622 = vmatprep.mubr.bf16.mxu0 0
        %623 = vmatmul.mubr.bf16.gmra.mxu0 %v564
        %v624 = vpop.f32.mrf.mxu0
        %v625 = vadd.f32 0.0, %v624
        %v626 = vpop.f32.mrf.mxu0
        %v627 = vpop.f32.mrf.mxu0
        %v628 = vadd.f32 0.0, %v627
        %v629 = vpop.f32.mrf.mxu0
        %630 = vdwg.mxu0
        %v631 = vadd.f32 %v392, %v601
        %v632 = vadd.f32 %v393, %v604
        %v633 = vadd.f32 %v394, %v609
        %v634 = vadd.f32 %v395, %v612
        %v635 = vadd.f32 %v396, %v617
        %v636 = vadd.f32 %v397, %v620
        %v637 = vadd.f32 %v398, %v625
        %v638 = vadd.f32 %v399, %v628
        %v640 = vshrl.u32 %v416, 16
        %v642 = vrot.slane %v640, 4
        %v643 = vshll.u32 %v416, 16
        %v645 = vrot.slane %v643, 5
        %v646 = vor.u32 %v642, %v645
        %v647 = vrot.slane %v646, 4
        %v649 = vshll.u32 %v417, 16
        %v651 = vrot.slane %v649, 5
        %v652 = vsel %vm420, %v647, %v651
        %s653 = scalar_lea.vmem %s1, 24
        %v654 = vld [vmem:[%s653] sm:$0xf]
        %v655 = vld [vmem:[%s653 + $0x4] sm:$0xf]
        %v656 = vunpack.c.l.b16 %v652
        %v657 = vpack.c.b16 %v538, %v537
        %v658 = vpack.c.b16 %v540, %v539
        %v659 = vpack.c.b16 %v542, %v541
        %v660 = vpack.c.b16 %v656, %v543
        %v663 = vunpack.c.l.b16 %v654
        %v664 = vunpack.c.l.b16 %v655
        %v665 = vpack.c.b16 %v664, %v663
        %v668 = vsel %vm214, %v657, 0
        %v671 = vsel %vm214, %v658, 0
        %v674 = vsel %vm214, %v659, 0
        %v677 = vsel %vm214, %v660, 0
        %679 = vmatprep.subr.bf16.mxu0 0
        %680 = vmatpush1.bf16.msra.mxu0 0
        %681 = vmatprep.subr.bf16.mxu0 0
        %682 = vmatpush1.bf16.msra.mxu0 0
        %683 = vmatprep.subr.bf16.mxu0 0
        %684 = vmatpush1.bf16.msra.mxu0 0
        %685 = vmatprep.subr.bf16.mxu0 0
        %686 = vmatpush1.bf16.msra.mxu0 0
        %687 = vmatprep.subr.bf16.mxu0 0
        %688 = vmatpush1.bf16.msra.mxu0 0
        %689 = vmatprep.subr.bf16.mxu0 0
        %690 = vmatpush1.bf16.msra.mxu0 0
        %691 = vmatprep.subr.bf16.mxu0 0
        %692 = vmatpush1.bf16.msra.mxu0 0
        %693 = vmatprep.subr.bf16.mxu0 0
        %694 = vmatpush1.bf16.msra.mxu0 %v665
        %695 = vmatprep.subr.bf16.mxu0 0
        %696 = vmatpush2.bf16.msra.mxu0 0
        %697 = vmatprep.subr.bf16.mxu0 0
        %698 = vmatpush2.bf16.msra.mxu0 0
        %699 = vmatprep.subr.bf16.mxu0 0
        %700 = vmatpush2.bf16.msra.mxu0 0
        %701 = vmatprep.subr.bf16.mxu0 0
        %702 = vmatpush2.bf16.msra.mxu0 0
        %703 = vmatprep.subr.bf16.mxu0 0
        %704 = vmatpush2.bf16.msra.mxu0 0
        %705 = vmatprep.subr.bf16.mxu0 0
        %706 = vmatpush2.bf16.msra.mxu0 0
        %707 = vmatprep.subr.bf16.mxu0 0
        %708 = vmatpush2.bf16.msra.mxu0 0
        %709 = vmatprep.subr.bf16.mxu0 0
        %710 = vmatpush2.bf16.msra.mxu0 0
        %711 = vmatprep.mubr.bf16.mxu0 0
        %712 = vmatmul.mubr.bf16.gmra.mxu0 %v668
        %v713 = vpop.f32.mrf.mxu0
        %v714 = vadd.f32 0.0, %v713
        %v715 = vpop.f32.mrf.mxu0
        %v716 = vpop.f32.mrf.mxu0
        %v717 = vadd.f32 0.0, %v716
        %v718 = vpop.f32.mrf.mxu0
        %719 = vmatprep.mubr.bf16.mxu0 0
        %720 = vmatmul.mubr.bf16.gmra.mxu0 %v671
        %v721 = vpop.f32.mrf.mxu0
        %v722 = vadd.f32 0.0, %v721
        %v723 = vpop.f32.mrf.mxu0
        %v724 = vpop.f32.mrf.mxu0
        %v725 = vadd.f32 0.0, %v724
        %v726 = vpop.f32.mrf.mxu0
        %727 = vmatprep.mubr.bf16.mxu0 0
        %728 = vmatmul.mubr.bf16.gmra.mxu0 %v674
        %v729 = vpop.f32.mrf.mxu0
        %v730 = vadd.f32 0.0, %v729
        %v731 = vpop.f32.mrf.mxu0
        %v732 = vpop.f32.mrf.mxu0
        %v733 = vadd.f32 0.0, %v732
        %v734 = vpop.f32.mrf.mxu0
        %735 = vmatprep.mubr.bf16.mxu0 0
        %736 = vmatmul.mubr.bf16.gmra.mxu0 %v677
        %v737 = vpop.f32.mrf.mxu0
        %v738 = vadd.f32 0.0, %v737
        %v739 = vpop.f32.mrf.mxu0
        %v740 = vpop.f32.mrf.mxu0
        %v741 = vadd.f32 0.0, %v740
        %v742 = vpop.f32.mrf.mxu0
        %743 = vdwg.mxu0
        %v744 = vadd.f32 %v631, %v714
        %v745 = vadd.f32 %v632, %v717
        %v746 = vadd.f32 %v633, %v722
        %v747 = vadd.f32 %v634, %v725
        %v748 = vadd.f32 %v635, %v730
        %v749 = vadd.f32 %v636, %v733
        %v750 = vadd.f32 %v637, %v738
        %v751 = vadd.f32 %v638, %v741
        %752 = vst [vmem:[%s163] sm:$0xff] %v744
        %753 = vst [vmem:[%s163 + $0x8] sm:$0xff] %v745
        %754 = vst [vmem:[%s163 + $0x10] sm:$0xff] %v746
        %755 = vst [vmem:[%s163 + $0x18] sm:$0xff] %v747
        %756 = vst [vmem:[%s163 + $0x20] sm:$0xff] %v748
        %757 = vst [vmem:[%s163 + $0x28] sm:$0xff] %v749
        %758 = vst [vmem:[%s163 + $0x30] sm:$0xff] %v750
        %759 = vst [vmem:[%s163 + $0x38] sm:$0xff] %v751
        %s760 = sand.u32 %s93, 1
        %s761 = scalar_lea.sflag [#allocation3], %s760
        %s762 = sand.u32 %s93, 1
        %s763 = smul.addr %s762, 64
        %s764 = scalar_lea.vmem [#allocation2], %s763
        // Predicated region
        $region33: #{tpu_custom_call.1} parent=31 // pred_check
          %p765 = pneg %p103
        $region34: #{tpu_custom_call.1} parent=31 // pred_check_branch
          %767 = sbr.rel (%p765) target = $region36
        $region35: #{tpu_custom_call.1} parent=31 // pred_region
          %s769 = ssub.s32 1024, 1024
          %770 = vsyncadd %s761, %s769
          %s771 = smul.addr %s17, 8
          %s772 = smul.addr %s771, 128
          %s773 = scalar_lea.hbm %s3, %s772
          %s774 = sshll.u32 %s764, 4
          %s775 = int_to_ptr.vmem [resolvable:$true] %s774
          %780 = dma.vmem_to_hbm [thread:$0]  %s775, 1024, %s773, %s761, 128, 128, 8
        $region36: #{tpu_custom_call.1} parent=31 // pred_fallthru
          _
      $region32: #{tpu_custom_call.1} parent=5 // pred_fallthru
        _
      %p781 = scmp.le.s32.totalorder 2, %s12
      // Predicated region
      $region37: #{tpu_custom_call.1} parent=5 // pred_check
        %p782 = pneg %p781
      $region38: #{tpu_custom_call.1} parent=5 // pred_check_branch
        %784 = sbr.rel (%p782) target = $region40
      $region39: #{tpu_custom_call.1} parent=5 // pred_region
        %s785 = ssub.s32 %s12, 2
        // Predicated region
        $region41: #{tpu_custom_call.1} parent=39 // pred_check
          %p786 = pneg %p109
        $region42: #{tpu_custom_call.1} parent=39 // pred_check_branch
          %788 = sbr.rel (%p786) target = $region44
        $region43: #{tpu_custom_call.1} parent=39 // pred_region
          %s789 = sand.u32 %s94, 1
          %s790 = scalar_lea.sflag [#allocation3], %s789
          %s791 = sand.u32 %s94, 1
          %s792 = smul.addr %s791, 64
          %s793 = scalar_lea.vmem [#allocation2], %s792
          %794 = dma.done %s790, 1024
        $region44: #{tpu_custom_call.1} parent=39 // pred_fallthru
          _
      $region40: #{tpu_custom_call.1} parent=5 // pred_fallthru
        _
    $region6: #{tpu_custom_call.1} parent=1 // loop_footer
      %s16 = sadd.s32 1, %s12
    $region7: #{tpu_custom_call.1} parent=1 // loop_footer_branch
      %11 = sbr.rel target = $region3
    $region8: #{tpu_custom_call.1} parent=1 // loop_exit
      _
    %795 = vsyncpa [#allocation3], 1
    %s796 = scalar_lea.sflag [#allocation3], 1
    %797 = vsyncpa %s796, 1

// kernel: tpu_custom_call.1
$region0: #{tpu_custom_call.1}
  #allocation0 [shape = 'u32[]', space=smem, size = 0x4, offset = 0x4, fixed_abs, tag = 'smem constant byte address 0x4 - core index']
  #allocation1 [shape = 'u32[144,128]{1,0:T(1,128)}', space=vmem, size = 0x12000, scoped, tag = 'internal scratch']
  %s0 = inlined_call_operand.vmem [shape: bf16[4,9,9,16], index: 0, kind: input, shape index: {}]
  %s1 = inlined_call_operand.vmem [shape: bf16[2,2,16,128], index: 1, kind: input, shape index: {}]
  %s2 = inlined_call_operand.vmem [shape: f32[1,128], index: 2, kind: input, shape index: {}]
  %s3 = inlined_call_operand.hbm [shape: f32[4,8,8,128], index: 3, kind: output, shape index: {}]
  %s4 = sld [smem:[#allocation0]]
  $region45: #{tpu_custom_call.1} parent=0
    _
  %s6 = ssub.s32 1, %s4
  %s7 = scalar_select 0, %s6, %s4
  $region1: #{tpu_custom_call.1} parent=0
    #allocation2 [shape = 'u8[65536]{0}', space=vmem, size = 0x10000, scoped, tag = 'output window, operand 0']
    #allocation3 [shape = 's32[2]{0}', space=sflag, size = 0x8, scoped, tag = 'scoped memory for tpu_custom_call.1']
    %8 = vsyncpa [#allocation3], 0
    %s9 = scalar_lea.sflag [#allocation3], 1
    %10 = vsyncpa %s9, 0
    loop: start=0, step=1, limit=6
    $region2: #{tpu_custom_call.1} parent=1 // loop_pre_header
      _
    $region3: #{tpu_custom_call.1} parent=1 // loop_header
      %s12 = sphi 0, %s16
      %p13 = scmp.ge.s32.totalorder %s12, 6
      %s22 = sphi 0, %s24
      %s25 = sphi 0, %s22
      %s26 = sphi 0, %s25
      %s42 = sphi 0, %s26
      %s46 = sphi 0, %s46
      %s48 = sphi 0, %s46
      %s49 = sphi 0, %s48
      %s63 = sphi 0, %s49
      %s67 = sphi 0, %s67
      %s69 = sphi 0, %s67
      %s70 = sphi 0, %s69
      %s84 = sphi 0, %s70
      %s90 = sphi 0, %s92
      %s93 = sphi 0, %s90
      %s94 = sphi 0, %s93
      %s110 = sphi 0, %s94
    $region4: #{tpu_custom_call.1} parent=1 // loop_header_branch
      %15 = sbr.rel (%p13) target = $region8
    $region5: #{tpu_custom_call.1} parent=1 // loop_body
      %s17 = ssub.s32 %s12, 1
      %s18 = ssub.s32 %s12, 2
      %s19 = sadd.s32 %s12, 1
      %s20 = ssub.s32 %s12, %s19
      %p21 = scmp.eq.s32.totalorder %s20, 0
      %s23 = sadd.s32 %s22, 1
      %s24 = scalar_select %p21, %s22, %s23
      %p27 = pneg %p21
      %p28 = scmp.eq.s32.totalorder %s12, 3
      %p29 = por %p27, %p28
      %p30 = scmp.ne.s32.totalorder %s22, %s25
      %p31 = scmp.eq.s32.totalorder %s12, 0
      %p32 = por %p30, %p31
      %p33 = scmp.ne.s32.totalorder %s22, %s25
      %p34 = scmp.eq.s32.totalorder %s17, 3
      %p35 = por %p33, %p34
      %p36 = scmp.ne.s32.totalorder %s25, %s26
      %p37 = scmp.eq.s32.totalorder %s17, 0
      %p38 = por %p36, %p37
      %p39 = scmp.ne.s32.totalorder %s25, %s26
      %p40 = scmp.eq.s32.totalorder %s18, 3
      %p41 = por %p39, %p40
      %p43 = scmp.ne.s32.totalorder %s26, %s42
      %p44 = scmp.eq.s32.totalorder %s18, 0
      %p45 = por %p43, %p44
      %s47 = sadd.s32 %s46, 1
      %p50 = scmp.eq.s32.totalorder %s12, 3
      %p51 = scmp.ne.s32.totalorder %s46, %s48
      %p52 = scmp.eq.s32.totalorder %s12, 0
      %p53 = por %p51, %p52
      %p54 = scmp.ne.s32.totalorder %s46, %s48
      %p55 = scmp.eq.s32.totalorder %s17, 3
      %p56 = por %p54, %p55
      %p57 = scmp.ne.s32.totalorder %s48, %s49
      %p58 = scmp.eq.s32.totalorder %s17, 0
      %p59 = por %p57, %p58
      %p60 = scmp.ne.s32.totalorder %s48, %s49
      %p61 = scmp.eq.s32.totalorder %s18, 3
      %p62 = por %p60, %p61
      %p64 = scmp.ne.s32.totalorder %s49, %s63
      %p65 = scmp.eq.s32.totalorder %s18, 0
      %p66 = por %p64, %p65
      %s68 = sadd.s32 %s67, 1
      %p71 = scmp.eq.s32.totalorder %s12, 3
      %p72 = scmp.ne.s32.totalorder %s67, %s69
      %p73 = scmp.eq.s32.totalorder %s12, 0
      %p74 = por %p72, %p73
      %p75 = scmp.ne.s32.totalorder %s67, %s69
      %p76 = scmp.eq.s32.totalorder %s17, 3
      %p77 = por %p75, %p76
      %p78 = scmp.ne.s32.totalorder %s69, %s70
      %p79 = scmp.eq.s32.totalorder %s17, 0
      %p80 = por %p78, %p79
      %p81 = scmp.ne.s32.totalorder %s69, %s70
      %p82 = scmp.eq.s32.totalorder %s18, 3
      %p83 = por %p81, %p82
      %p85 = scmp.ne.s32.totalorder %s70, %s84
      %p86 = scmp.eq.s32.totalorder %s18, 0
      %p87 = por %p85, %p86
      %s88 = ssub.s32 %s12, %s19
      %p89 = scmp.eq.s32.totalorder %s88, 0
      %s91 = sadd.s32 %s90, 1
      %s92 = scalar_select %p89, %s90, %s91
      %p95 = pneg %p89
      %p96 = scmp.eq.s32.totalorder %s12, 3
      %p97 = por %p95, %p96
      %p98 = scmp.ne.s32.totalorder %s90, %s93
      %p99 = scmp.eq.s32.totalorder %s12, 0
      %p100 = por %p98, %p99
      %p101 = scmp.ne.s32.totalorder %s90, %s93
      %p102 = scmp.eq.s32.totalorder %s17, 3
      %p103 = por %p101, %p102
      %p104 = scmp.ne.s32.totalorder %s93, %s94
      %p105 = scmp.eq.s32.totalorder %s17, 0
      %p106 = por %p104, %p105
      %p107 = scmp.ne.s32.totalorder %s93, %s94
      %p108 = scmp.eq.s32.totalorder %s18, 3
      %p109 = por %p107, %p108
      %p111 = scmp.ne.s32.totalorder %s94, %s110
      %p112 = scmp.eq.s32.totalorder %s18, 0
      %p113 = por %p111, %p112
      %p114 = scmp.le.s32.totalorder 1, %s12
      %p115 = scmp.lt.s32.totalorder %s12, 5
      %p116 = pnand %p114, %p115
      %p117 = pneg %p116
      // Predicated region
      $region9: #{tpu_custom_call.1} parent=5 // pred_check
        _
      $region10: #{tpu_custom_call.1} parent=5 // pred_check_branch
        %119 = sbr.rel (%p116) target = $region12
      $region11: #{tpu_custom_call.1} parent=5 // pred_region
        %s120 = ssub.s32 %s12, 1
        // Predicated region
        $region13: #{tpu_custom_call.1} parent=11 // pred_check
          %p121 = pneg %p59
        $region14: #{tpu_custom_call.1} parent=11 // pred_check_branch
          %123 = sbr.rel (%p121) target = $region16
        $region15: #{tpu_custom_call.1} parent=11 // pred_region
          _
        $region16: #{tpu_custom_call.1} parent=11 // pred_fallthru
          _
        // Predicated region
        $region17: #{tpu_custom_call.1} parent=11 // pred_check
          %p124 = pneg %p80
        $region18: #{tpu_custom_call.1} parent=11 // pred_check_branch
          %126 = sbr.rel (%p124) target = $region20
        $region19: #{tpu_custom_call.1} parent=11 // pred_region
          _
        $region20: #{tpu_custom_call.1} parent=11 // pred_fallthru
          _
      $region12: #{tpu_custom_call.1} parent=5 // pred_fallthru
        _
      %p127 = scmp.lt.s32.totalorder %s12, 4
      // Predicated region
      $region21: #{tpu_custom_call.1} parent=5 // pred_check
        %p128 = pneg %p127
      $region22: #{tpu_custom_call.1} parent=5 // pred_check_branch
        %130 = sbr.rel (%p128) target = $region24
      $region23: #{tpu_custom_call.1} parent=5 // pred_region
        // Predicated region
        $region25: #{tpu_custom_call.1} parent=23 // pred_check
          %p131 = pneg %p32
        $region26: #{tpu_custom_call.1} parent=23 // pred_check_branch
          %133 = sbr.rel (%p131) target = $region28
        $region27: #{tpu_custom_call.1} parent=23 // pred_region
          %p134 = scmp.lt.s32.totalorder %s12, 3
          %s135 = scalar_select %p134, %s12, 3
          %s136 = smul.addr %s135, 18
          %s137 = smul.addr %s136, 4
          %s138 = scalar_lea.vmem %s0, %s137
        $region28: #{tpu_custom_call.1} parent=23 // pred_fallthru
          _
      $region24: #{tpu_custom_call.1} parent=5 // pred_fallthru
        _
      %p139 = scmp.le.s32.totalorder 1, %s12
      %p140 = scmp.lt.s32.totalorder %s12, 5
      %p141 = pnand %p139, %p140
      %p142 = pneg %p141
      // Predicated region
      $region29: #{tpu_custom_call.1} parent=5 // pred_check
        _
      $region30: #{tpu_custom_call.1} parent=5 // pred_check_branch
        %144 = sbr.rel (%p141) target = $region32
      $region31: #{tpu_custom_call.1} parent=5 // pred_region
        %s145 = ssub.s32 %s12, 1
        %p146 = scmp.lt.s32.totalorder %s17, 3
        %s147 = scalar_select %p146, %s17, 3
        %s148 = smul.addr %s147, 18
        %s149 = smul.addr %s148, 4
        %s150 = scalar_lea.vmem %s0, %s149
        %p151 = pneg %p38
        %p152 = pneg %p35
        %p153 = pneg %p59
        %p154 = pneg %p56
        %p155 = pneg %p80
        %p156 = pneg %p77
        %p157 = pneg %p106
        %p158 = pneg %p103
        %s159 = sand.u32 %s93, 1
        %s160 = scalar_lea.sflag [#allocation3], %s159
        %s161 = sand.u32 %s93, 1
        %s162 = smul.addr %s161, 64
        %s163 = scalar_lea.vmem [#allocation2], %s162
        %p164 = scmp.lt.s32.totalorder %s17, 3
        %s165 = scalar_select %p164, %s17, 3
        %s166 = smul.addr %s165, 18
        %s167 = smul.addr %s166, 4
        %s168 = scalar_lea.vmem %s0, %s167
        %v170 = vld [vmem:[%s2] sm:$0x1]
        %v172 = vlaneseq
        %v173 = vshrl.u32 %v172, 7
        %v174 = vsub.s32 0, %v173
        %v175 = vrot.slane %v170, %v174
        %v177 = vld [vmem:[%s168] sm:$0xf]
        %v178 = vld [vmem:[%s168 + $0x8] sm:$0xf]
        %v179 = vld [vmem:[%s168 + $0x10] sm:$0xf]
        %v180 = vld [vmem:[%s168 + $0x18] sm:$0xf]
        %v181 = vld [vmem:[%s168 + $0x20] sm:$0xf]
        %v182 = vld [vmem:[%s168 + $0x28] sm:$0xf]
        %v183 = vld [vmem:[%s168 + $0x30] sm:$0xf]
        %v184 = vld [vmem:[%s168 + $0x38] sm:$0xf]
        %v185 = vld [vmem:[%s168 + $0x40] sm:$0xf]
        %v186 = vld [vmem:[%s1] sm:$0xf]
        %v187 = vld [vmem:[%s1 + $0x4] sm:$0xf]
        %v196 = vunpack.c.l.b16 %v177
        %v197 = vunpack.c.l.b16 %v178
        %v198 = vunpack.c.l.b16 %v179
        %v199 = vunpack.c.l.b16 %v180
        %v200 = vunpack.c.l.b16 %v181
        %v201 = vunpack.c.l.b16 %v182
        %v202 = vunpack.c.l.b16 %v183
        %v203 = vunpack.c.l.b16 %v184
        %v204 = vpack.c.b16 %v197, %v196
        %v205 = vpack.c.b16 %v199, %v198
        %v206 = vpack.c.b16 %v201, %v200
        %v207 = vpack.c.b16 %v203, %v202
        %v210 = vunpack.c.l.b16 %v186
        %v211 = vunpack.c.l.b16 %v187
        %v212 = vpack.c.b16 %v211, %v210
        %vm214 = vcmask 130048
        %v216 = vsel %vm214, %v204, 0
        %v219 = vsel %vm214, %v205, 0
        %v222 = vsel %vm214, %v206, 0
        %v225 = vsel %vm214, %v207, 0
        %227 = vmatprep.subr.bf16.mxu0 0
        %228 = vmatpush1.bf16.msra.mxu0 0
        %229 = vmatprep.subr.bf16.mxu0 0
        %230 = vmatpush1.bf16.msra.mxu0 0
        %231 = vmatprep.subr.bf16.mxu0 0
        %232 = vmatpush1.bf16.msra.mxu0 0
        %233 = vmatprep.subr.bf16.mxu0 0
        %234 = vmatpush1.bf16.msra.mxu0 0
        %235 = vmatprep.subr.bf16.mxu0 0
        %236 = vmatpush1.bf16.msra.mxu0 0
        %237 = vmatprep.subr.bf16.mxu0 0
        %238 = vmatpush1.bf16.msra.mxu0 0
        %239 = vmatprep.subr.bf16.mxu0 0
        %240 = vmatpush1.bf16.msra.mxu0 0
        %241 = vmatprep.subr.bf16.mxu0 0
        %242 = vmatpush1.bf16.msra.mxu0 %v212
        %243 = vmatprep.subr.bf16.mxu0 0
        %244 = vmatpush2.bf16.msra.mxu0 0
        %245 = vmatprep.subr.bf16.mxu0 0
        %246 = vmatpush2.bf16.msra.mxu0 0
        %247 = vmatprep.subr.bf16.mxu0 0
        %248 = vmatpush2.bf16.msra.mxu0 0
        %249 = vmatprep.subr.bf16.mxu0 0
        %250 = vmatpush2.bf16.msra.mxu0 0
        %251 = vmatprep.subr.bf16.mxu0 0
        %252 = vmatpush2.bf16.msra.mxu0 0
        %253 = vmatprep.subr.bf16.mxu0 0
        %254 = vmatpush2.bf16.msra.mxu0 0
        %255 = vmatprep.subr.bf16.mxu0 0
        %256 = vmatpush2.bf16.msra.mxu0 0
        %257 = vmatprep.subr.bf16.mxu0 0
        %258 = vmatpush2.bf16.msra.mxu0 0
        %259 = vmatprep.mubr.bf16.mxu0 0
        %260 = vmatmul.mubr.bf16.gmra.mxu0 %v216
        %v261 = vpop.f32.mrf.mxu0
        %v262 = vadd.f32 0.0, %v261
        %v263 = vpop.f32.mrf.mxu0
        %v264 = vpop.f32.mrf.mxu0
        %v265 = vadd.f32 0.0, %v264
        %v266 = vpop.f32.mrf.mxu0
        %267 = vmatprep.mubr.bf16.mxu0 0
        %268 = vmatmul.mubr.bf16.gmra.mxu0 %v219
        %v269 = vpop.f32.mrf.mxu0
        %v270 = vadd.f32 0.0, %v269
        %v271 = vpop.f32.mrf.mxu0
        %v272 = vpop.f32.mrf.mxu0
        %v273 = vadd.f32 0.0, %v272
        %v274 = vpop.f32.mrf.mxu0
        %275 = vmatprep.mubr.bf16.mxu0 0
        %276 = vmatmul.mubr.bf16.gmra.mxu0 %v222
        %v277 = vpop.f32.mrf.mxu0
        %v278 = vadd.f32 0.0, %v277
        %v279 = vpop.f32.mrf.mxu0
        %v280 = vpop.f32.mrf.mxu0
        %v281 = vadd.f32 0.0, %v280
        %v282 = vpop.f32.mrf.mxu0
        %283 = vmatprep.mubr.bf16.mxu0 0
        %284 = vmatmul.mubr.bf16.gmra.mxu0 %v225
        %v285 = vpop.f32.mrf.mxu0
        %v286 = vadd.f32 0.0, %v285
        %v287 = vpop.f32.mrf.mxu0
        %v288 = vpop.f32.mrf.mxu0
        %v289 = vadd.f32 0.0, %v288
        %v290 = vpop.f32.mrf.mxu0
        %291 = vdwg.mxu0
        %v292 = vadd.f32 %v175, %v262
        %v293 = vadd.f32 %v175, %v265
        %v294 = vadd.f32 %v175, %v270
        %v295 = vadd.f32 %v175, %v273
        %v296 = vadd.f32 %v175, %v278
        %v297 = vadd.f32 %v175, %v281
        %v298 = vadd.f32 %v175, %v286
        %v299 = vadd.f32 %v175, %v289
        %s300 = scalar_lea.vmem %s1, 16
        %v301 = vld [vmem:[%s300] sm:$0xf]
        %v302 = vld [vmem:[%s300 + $0x4] sm:$0xf]
        %v304 = vunpack.c.l.b16 %v185
        %v305 = vpack.c.b16 %v198, %v197
        %v306 = vpack.c.b16 %v200, %v199
        %v307 = vpack.c.b16 %v202, %v201
        %v308 = vpack.c.b16 %v304, %v203
        %v311 = vunpack.c.l.b16 %v301
        %v312 = vunpack.c.l.b16 %v302
        %v313 = vpack.c.b16 %v312, %v311
        %v316 = vsel %vm214, %v305, 0
        %v319 = vsel %vm214, %v306, 0
        %v322 = vsel %vm214, %v307, 0
        %v325 = vsel %vm214, %v308, 0
        %327 = vmatprep.subr.bf16.mxu0 0
        %328 = vmatpush1.bf16.msra.mxu0 0
        %329 = vmatprep.subr.bf16.mxu0 0
        %330 = vmatpush1.bf16.msra.mxu0 0
        %331 = vmatprep.subr.bf16.mxu0 0
        %332 = vmatpush1.bf16.msra.mxu0 0
        %333 = vmatprep.subr.bf16.mxu0 0
        %334 = vmatpush1.bf16.msra.mxu0 0
        %335 = vmatprep.subr.bf16.mxu0 0
        %336 = vmatpush1.bf16.msra.mxu0 0
        %337 = vmatprep.subr.bf16.mxu0 0
        %338 = vmatpush1.bf16.msra.mxu0 0
        %339 = vmatprep.subr.bf16.mxu0 0
        %340 = vmatpush1.bf16.msra.mxu0 0
        %341 = vmatprep.subr.bf16.mxu0 0
        %342 = vmatpush1.bf16.msra.mxu0 %v313
        %343 = vmatprep.subr.bf16.mxu0 0
        %344 = vmatpush2.bf16.msra.mxu0 0
        %345 = vmatprep.subr.bf16.mxu0 0
        %346 = vmatpush2.bf16.msra.mxu0 0
        %347 = vmatprep.subr.bf16.mxu0 0
        %348 = vmatpush2.bf16.msra.mxu0 0
        %349 = vmatprep.subr.bf16.mxu0 0
        %350 = vmatpush2.bf16.msra.mxu0 0
        %351 = vmatprep.subr.bf16.mxu0 0
        %352 = vmatpush2.bf16.msra.mxu0 0
        %353 = vmatprep.subr.bf16.mxu0 0
        %354 = vmatpush2.bf16.msra.mxu0 0
        %355 = vmatprep.subr.bf16.mxu0 0
        %356 = vmatpush2.bf16.msra.mxu0 0
        %357 = vmatprep.subr.bf16.mxu0 0
        %358 = vmatpush2.bf16.msra.mxu0 0
        %359 = vmatprep.mubr.bf16.mxu0 0
        %360 = vmatmul.mubr.bf16.gmra.mxu0 %v316
        %v361 = vpop.f32.mrf.mxu0
        %v362 = vadd.f32 0.0, %v361
        %v363 = vpop.f32.mrf.mxu0
        %v364 = vpop.f32.mrf.mxu0
        %v365 = vadd.f32 0.0, %v364
        %v366 = vpop.f32.mrf.mxu0
        %367 = vmatprep.mubr.bf16.mxu0 0
        %368 = vmatmul.mubr.bf16.gmra.mxu0 %v319
        %v369 = vpop.f32.mrf.mxu0
        %v370 = vadd.f32 0.0, %v369
        %v371 = vpop.f32.mrf.mxu0
        %v372 = vpop.f32.mrf.mxu0
        %v373 = vadd.f32 0.0, %v372
        %v374 = vpop.f32.mrf.mxu0
        %375 = vmatprep.mubr.bf16.mxu0 0
        %376 = vmatmul.mubr.bf16.gmra.mxu0 %v322
        %v377 = vpop.f32.mrf.mxu0
        %v378 = vadd.f32 0.0, %v377
        %v379 = vpop.f32.mrf.mxu0
        %v380 = vpop.f32.mrf.mxu0
        %v381 = vadd.f32 0.0, %v380
        %v382 = vpop.f32.mrf.mxu0
        %383 = vmatprep.mubr.bf16.mxu0 0
        %384 = vmatmul.mubr.bf16.gmra.mxu0 %v325
        %v385 = vpop.f32.mrf.mxu0
        %v386 = vadd.f32 0.0, %v385
        %v387 = vpop.f32.mrf.mxu0
        %v388 = vpop.f32.mrf.mxu0
        %v389 = vadd.f32 0.0, %v388
        %v390 = vpop.f32.mrf.mxu0
        %391 = vdwg.mxu0
        %v392 = vadd.f32 %v292, %v362
        %v393 = vadd.f32 %v293, %v365
        %v394 = vadd.f32 %v294, %v370
        %v395 = vadd.f32 %v295, %v373
        %v396 = vadd.f32 %v296, %v378
        %v397 = vadd.f32 %v297, %v381
        %v398 = vadd.f32 %v298, %v386
        %v399 = vadd.f32 %v299, %v389
        %v400 = vld [vmem:[%s168] sm:$0xf]
        %v401 = vld [vmem:[%s168 + $0x4] sm:$0x1]
        %v402 = vld [vmem:[%s168 + $0x8] sm:$0xf]
        %v403 = vld [vmem:[%s168 + $0xc] sm:$0x1]
        %v404 = vld [vmem:[%s168 + $0x10] sm:$0xf]
        %v405 = vld [vmem:[%s168 + $0x14] sm:$0x1]
        %v406 = vld [vmem:[%s168 + $0x18] sm:$0xf]
        %v407 = vld [vmem:[%s168 + $0x1c] sm:$0x1]
        %v408 = vld [vmem:[%s168 + $0x20] sm:$0xf]
        %v409 = vld [vmem:[%s168 + $0x24] sm:$0x1]
        %v410 = vld [vmem:[%s168 + $0x28] sm:$0xf]
        %v411 = vld [vmem:[%s168 + $0x2c] sm:$0x1]
        %v412 = vld [vmem:[%s168 + $0x30] sm:$0xf]
        %v413 = vld [vmem:[%s168 + $0x34] sm:$0x1]
        %v414 = vld [vmem:[%s168 + $0x38] sm:$0xf]
        %v415 = vld [vmem:[%s168 + $0x3c] sm:$0x1]
        %v416 = vld [vmem:[%s168 + $0x40] sm:$0xf]
        %v417 = vld [vmem:[%s168 + $0x44] sm:$0x1]
        %vm418 = vsmask.f32 3328
        %vm419 = vsmask.f32 7440
        %vm420 = vmor %vm418, %vm419
        %v422 = vshrl.u32 %v400, 16
        %v424 = vrot.slane %v422, 4
        %v425 = vshll.u32 %v400, 16
        %v427 = vrot.slane %v425, 5
        %v428 = vor.u32 %v424, %v427
        %v429 = vrot.slane %v428, 4
        %v431 = vshll.u32 %v401, 16
        %v433 = vrot.slane %v431, 5
        %v434 = vsel %vm420, %v429, %v433
        %v436 = vshrl.u32 %v402, 16
        %v438 = vrot.slane %v436, 4
        %v439 = vshll.u32 %v402, 16
        %v441 = vrot.slane %v439, 5
        %v442 = vor.u32 %v438, %v441
        %v443 = vrot.slane %v442, 4
        %v445 = vshll.u32 %v403, 16
        %v447 = vrot.slane %v445, 5
        %v448 = vsel %vm420, %v443, %v447
        %v450 = vshrl.u32 %v404, 16
        %v452 = vrot.slane %v450, 4
        %v453 = vshll.u32 %v404, 16
        %v455 = vrot.slane %v453, 5
        %v456 = vor.u32 %v452, %v455
        %v457 = vrot.slane %v456, 4
        %v459 = vshll.u32 %v405, 16
        %v461 = vrot.slane %v459, 5
        %v462 = vsel %vm420, %v457, %v461
        %v464 = vshrl.u32 %v406, 16
        %v466 = vrot.slane %v464, 4
        %v467 = vshll.u32 %v406, 16
        %v469 = vrot.slane %v467, 5
        %v470 = vor.u32 %v466, %v469
        %v471 = vrot.slane %v470, 4
        %v473 = vshll.u32 %v407, 16
        %v475 = vrot.slane %v473, 5
        %v476 = vsel %vm420, %v471, %v475
        %v478 = vshrl.u32 %v408, 16
        %v480 = vrot.slane %v478, 4
        %v481 = vshll.u32 %v408, 16
        %v483 = vrot.slane %v481, 5
        %v484 = vor.u32 %v480, %v483
        %v485 = vrot.slane %v484, 4
        %v487 = vshll.u32 %v409, 16
        %v489 = vrot.slane %v487, 5
        %v490 = vsel %vm420, %v485, %v489
        %v492 = vshrl.u32 %v410, 16
        %v494 = vrot.slane %v492, 4
        %v495 = vshll.u32 %v410, 16
        %v497 = vrot.slane %v495, 5
        %v498 = vor.u32 %v494, %v497
        %v499 = vrot.slane %v498, 4
        %v501 = vshll.u32 %v411, 16
        %v503 = vrot.slane %v501, 5
        %v504 = vsel %vm420, %v499, %v503
        %v506 = vshrl.u32 %v412, 16
        %v508 = vrot.slane %v506, 4
        %v509 = vshll.u32 %v412, 16
        %v511 = vrot.slane %v509, 5
        %v512 = vor.u32 %v508, %v511
        %v513 = vrot.slane %v512, 4
        %v515 = vshll.u32 %v413, 16
        %v517 = vrot.slane %v515, 5
        %v518 = vsel %vm420, %v513, %v517
        %v520 = vshrl.u32 %v414, 16
        %v522 = vrot.slane %v520, 4
        %v523 = vshll.u32 %v414, 16
        %v525 = vrot.slane %v523, 5
        %v526 = vor.u32 %v522, %v525
        %v527 = vrot.slane %v526, 4
        %v529 = vshll.u32 %v415, 16
        %v531 = vrot.slane %v529, 5
        %v532 = vsel %vm420, %v527, %v531
        %s533 = scalar_lea.vmem %s1, 8
        %v534 = vld [vmem:[%s533] sm:$0xf]
        %v535 = vld [vmem:[%s533 + $0x4] sm:$0xf]
        %v536 = vunpack.c.l.b16 %v434
        %v537 = vunpack.c.l.b16 %v448
        %v538 = vunpack.c.l.b16 %v462
        %v539 = vunpack.c.l.b16 %v476
        %v540 = vunpack.c.l.b16 %v490
        %v541 = vunpack.c.l.b16 %v504
        %v542 = vunpack.c.l.b16 %v518
        %v543 = vunpack.c.l.b16 %v532
        %v544 = vpack.c.b16 %v537, %v536
        %v545 = vpack.c.b16 %v539, %v538
        %v546 = vpack.c.b16 %v541, %v540
        %v547 = vpack.c.b16 %v543, %v542
        %v550 = vunpack.c.l.b16 %v534
        %v551 = vunpack.c.l.b16 %v535
        %v552 = vpack.c.b16 %v551, %v550
        %v555 = vsel %vm214, %v544, 0
        %v558 = vsel %vm214, %v545, 0
        %v561 = vsel %vm214, %v546, 0
        %v564 = vsel %vm214, %v547, 0
        %566 = vmatprep.subr.bf16.mxu0 0
        %567 = vmatpush1.bf16.msra.mxu0 0
        %568 = vmatprep.subr.bf16.mxu0 0
        %569 = vmatpush1.bf16.msra.mxu0 0
        %570 = vmatprep.subr.bf16.mxu0 0
        %571 = vmatpush1.bf16.msra.mxu0 0
        %572 = vmatprep.subr.bf16.mxu0 0
        %573 = vmatpush1.bf16.msra.mxu0 0
        %574 = vmatprep.subr.bf16.mxu0 0
        %575 = vmatpush1.bf16.msra.mxu0 0
        %576 = vmatprep.subr.bf16.mxu0 0
        %577 = vmatpush1.bf16.msra.mxu0 0
        %578 = vmatprep.subr.bf16.mxu0 0
        %579 = vmatpush1.bf16.msra.mxu0 0
        %580 = vmatprep.subr.bf16.mxu0 0
        %581 = vmatpush1.bf16.msra.mxu0 %v552
        %582 = vmatprep.subr.bf16.mxu0 0
        %583 = vmatpush2.bf16.msra.mxu0 0
        %584 = vmatprep.subr.bf16.mxu0 0
        %585 = vmatpush2.bf16.msra.mxu0 0
        %586 = vmatprep.subr.bf16.mxu0 0
        %587 = vmatpush2.bf16.msra.mxu0 0
        %588 = vmatprep.subr.bf16.mxu0 0
        %589 = vmatpush2.bf16.msra.mxu0 0
        %590 = vmatprep.subr.bf16.mxu0 0
        %591 = vmatpush2.bf16.msra.mxu0 0
        %592 = vmatprep.subr.bf16.mxu0 0
        %593 = vmatpush2.bf16.msra.mxu0 0
        %594 = vmatprep.subr.bf16.mxu0 0
        %595 = vmatpush2.bf16.msra.mxu0 0
        %596 = vmatprep.subr.bf16.mxu0 0
        %597 = vmatpush2.bf16.msra.mxu0 0
        %598 = vmatprep.mubr.bf16.mxu0 0
        %599 = vmatmul.mubr.bf16.gmra.mxu0 %v555
        %v600 = vpop.f32.mrf.mxu0
        %v601 = vadd.f32 0.0, %v600
        %v602 = vpop.f32.mrf.mxu0
        %v603 = vpop.f32.mrf.mxu0
        %v604 = vadd.f32 0.0, %v603
        %v605 = vpop.f32.mrf.mxu0
        %606 = vmatprep.mubr.bf16.mxu0 0
        %607 = vmatmul.mubr.bf16.gmra.mxu0 %v558
        %v608 = vpop.f32.mrf.mxu0
        %v609 = vadd.f32 0.0, %v608
        %v610 = vpop.f32.mrf.mxu0
        %v611 = vpop.f32.mrf.mxu0
        %v612 = vadd.f32 0.0, %v611
        %v613 = vpop.f32.mrf.mxu0
        %614 = vmatprep.mubr.bf16.mxu0 0
        %615 = vmatmul.mubr.bf16.gmra.mxu0 %v561
        %v616 = vpop.f32.mrf.mxu0
        %v617 = vadd.f32 0.0, %v616
        %v618 = vpop.f32.mrf.mxu0
        %v619 = vpop.f32.mrf.mxu0
        %v620 = vadd.f32 0.0, %v619
        %v621 = vpop.f32.mrf.mxu0
        %622 = vmatprep.mubr.bf16.mxu0 0
        %623 = vmatmul.mubr.bf16.gmra.mxu0 %v564
        %v624 = vpop.f32.mrf.mxu0
        %v625 = vadd.f32 0.0, %v624
        %v626 = vpop.f32.mrf.mxu0
        %v627 = vpop.f32.mrf.mxu0
        %v628 = vadd.f32 0.0, %v627
        %v629 = vpop.f32.mrf.mxu0
        %630 = vdwg.mxu0
        %v631 = vadd.f32 %v392, %v601
        %v632 = vadd.f32 %v393, %v604
        %v633 = vadd.f32 %v394, %v609
        %v634 = vadd.f32 %v395, %v612
        %v635 = vadd.f32 %v396, %v617
        %v636 = vadd.f32 %v397, %v620
        %v637 = vadd.f32 %v398, %v625
        %v638 = vadd.f32 %v399, %v628
        %v640 = vshrl.u32 %v416, 16
        %v642 = vrot.slane %v640, 4
        %v643 = vshll.u32 %v416, 16
        %v645 = vrot.slane %v643, 5
        %v646 = vor.u32 %v642, %v645
        %v647 = vrot.slane %v646, 4
        %v649 = vshll.u32 %v417, 16
        %v651 = vrot.slane %v649, 5
        %v652 = vsel %vm420, %v647, %v651
        %s653 = scalar_lea.vmem %s1, 24
        %v654 = vld [vmem:[%s653] sm:$0xf]
        %v655 = vld [vmem:[%s653 + $0x4] sm:$0xf]
        %v656 = vunpack.c.l.b16 %v652
        %v657 = vpack.c.b16 %v538, %v537
        %v658 = vpack.c.b16 %v540, %v539
        %v659 = vpack.c.b16 %v542, %v541
        %v660 = vpack.c.b16 %v656, %v543
        %v663 = vunpack.c.l.b16 %v654
        %v664 = vunpack.c.l.b16 %v655
        %v665 = vpack.c.b16 %v664, %v663
        %v668 = vsel %vm214, %v657, 0
        %v671 = vsel %vm214, %v658, 0
        %v674 = vsel %vm214, %v659, 0
        %v677 = vsel %vm214, %v660, 0
        %679 = vmatprep.subr.bf16.mxu0 0
        %680 = vmatpush1.bf16.msra.mxu0 0
        %681 = vmatprep.subr.bf16.mxu0 0
        %682 = vmatpush1.bf16.msra.mxu0 0
        %683 = vmatprep.subr.bf16.mxu0 0
        %684 = vmatpush1.bf16.msra.mxu0 0
        %685 = vmatprep.subr.bf16.mxu0 0
        %686 = vmatpush1.bf16.msra.mxu0 0
        %687 = vmatprep.subr.bf16.mxu0 0
        %688 = vmatpush1.bf16.msra.mxu0 0
        %689 = vmatprep.subr.bf16.mxu0 0
        %690 = vmatpush1.bf16.msra.mxu0 0
        %691 = vmatprep.subr.bf16.mxu0 0
        %692 = vmatpush1.bf16.msra.mxu0 0
        %693 = vmatprep.subr.bf16.mxu0 0
        %694 = vmatpush1.bf16.msra.mxu0 %v665
        %695 = vmatprep.subr.bf16.mxu0 0
        %696 = vmatpush2.bf16.msra.mxu0 0
        %697 = vmatprep.subr.bf16.mxu0 0
        %698 = vmatpush2.bf16.msra.mxu0 0
        %699 = vmatprep.subr.bf16.mxu0 0
        %700 = vmatpush2.bf16.msra.mxu0 0
        %701 = vmatprep.subr.bf16.mxu0 0
        %702 = vmatpush2.bf16.msra.mxu0 0
        %703 = vmatprep.subr.bf16.mxu0 0
        %704 = vmatpush2.bf16.msra.mxu0 0
        %705 = vmatprep.subr.bf16.mxu0 0
        %706 = vmatpush2.bf16.msra.mxu0 0
        %707 = vmatprep.subr.bf16.mxu0 0
        %708 = vmatpush2.bf16.msra.mxu0 0
        %709 = vmatprep.subr.bf16.mxu0 0
        %710 = vmatpush2.bf16.msra.mxu0 0
        %711 = vmatprep.mubr.bf16.mxu0 0
        %712 = vmatmul.mubr.bf16.gmra.mxu0 %v668
        %v713 = vpop.f32.mrf.mxu0
        %v714 = vadd.f32 0.0, %v713
        %v715 = vpop.f32.mrf.mxu0
        %v716 = vpop.f32.mrf.mxu0
        %v717 = vadd.f32 0.0, %v716
        %v718 = vpop.f32.mrf.mxu0
        %719 = vmatprep.mubr.bf16.mxu0 0
        %720 = vmatmul.mubr.bf16.gmra.mxu0 %v671
        %v721 = vpop.f32.mrf.mxu0
        %v722 = vadd.f32 0.0, %v721
        %v723 = vpop.f32.mrf.mxu0
        %v724 = vpop.f32.mrf.mxu0
        %v725 = vadd.f32 0.0, %v724
        %v726 = vpop.f32.mrf.mxu0
        %727 = vmatprep.mubr.bf16.mxu0 0
        %728 = vmatmul.mubr.bf16.gmra.mxu0 %v674
        %v729 = vpop.f32.mrf.mxu0
        %v730 = vadd.f32 0.0, %v729
        %v731 = vpop.f32.mrf.mxu0
        %v732 = vpop.f32.mrf.mxu0
        %v733 = vadd.f32 0.0, %v732
        %v734 = vpop.f32.mrf.mxu0
        %735 = vmatprep.mubr.bf16.mxu0 0
        %736 = vmatmul.mubr.bf16.gmra.mxu0 %v677
        %v737 = vpop.f32.mrf.mxu0
        %v738 = vadd.f32 0.0, %v737
        %v739 = vpop.f32.mrf.mxu0
        %v740 = vpop.f32.mrf.mxu0
        %v741 = vadd.f32 0.0, %v740
        %v742 = vpop.f32.mrf.mxu0
        %743 = vdwg.mxu0
        %v744 = vadd.f32 %v631, %v714
        %v745 = vadd.f32 %v632, %v717
        %v746 = vadd.f32 %v633, %v722
        %v747 = vadd.f32 %v634, %v725
        %v748 = vadd.f32 %v635, %v730
        %v749 = vadd.f32 %v636, %v733
        %v750 = vadd.f32 %v637, %v738
        %v751 = vadd.f32 %v638, %v741
        %752 = vst [vmem:[%s163] sm:$0xff] %v744
        %753 = vst [vmem:[%s163 + $0x8] sm:$0xff] %v745
        %754 = vst [vmem:[%s163 + $0x10] sm:$0xff] %v746
        %755 = vst [vmem:[%s163 + $0x18] sm:$0xff] %v747
        %756 = vst [vmem:[%s163 + $0x20] sm:$0xff] %v748
        %757 = vst [vmem:[%s163 + $0x28] sm:$0xff] %v749
        %758 = vst [vmem:[%s163 + $0x30] sm:$0xff] %v750
        %759 = vst [vmem:[%s163 + $0x38] sm:$0xff] %v751
        %s760 = sand.u32 %s93, 1
        %s761 = scalar_lea.sflag [#allocation3], %s760
        %s762 = sand.u32 %s93, 1
        %s763 = smul.addr %s762, 64
        %s764 = scalar_lea.vmem [#allocation2], %s763
        // Predicated region
        $region33: #{tpu_custom_call.1} parent=31 // pred_check
          %p765 = pneg %p103
        $region34: #{tpu_custom_call.1} parent=31 // pred_check_branch
          %767 = sbr.rel (%p765) target = $region36
        $region35: #{tpu_custom_call.1} parent=31 // pred_region
          %s769 = ssub.s32 1024, 1024
          %770 = vsyncadd %s761, %s769
          %s771 = smul.addr %s17, 8
          %s772 = smul.addr %s771, 128
          %s773 = scalar_lea.hbm %s3, %s772
          %s774 = sshll.u32 %s764, 4
          %s775 = int_to_ptr.vmem [resolvable:$true] %s774
          %780 = dma.vmem_to_hbm [thread:$0]  %s775, 1024, %s773, %s761, 128, 128, 8
        $region36: #{tpu_custom_call.1} parent=31 // pred_fallthru
          _
      $region32: #{tpu_custom_call.1} parent=5 // pred_fallthru
        _
      %p781 = scmp.le.s32.totalorder 2, %s12
      // Predicated region
      $region37: #{tpu_custom_call.1} parent=5 // pred_check
        %p782 = pneg %p781
      $region38: #{tpu_custom_call.1} parent=5 // pred_check_branch
        %784 = sbr.rel (%p782) target = $region40
      $region39: #{tpu_custom_call.1} parent=5 // pred_region
        %s785 = ssub.s32 %s12, 2
        // Predicated region
        $region41: #{tpu_custom_call.1} parent=39 // pred_check
          %p786 = pneg %p109
        $region42: #{tpu_custom_call.1} parent=39 // pred_check_branch
          %788 = sbr.rel (%p786) target = $region44
        $region43: #{tpu_custom_call.1} parent=39 // pred_region
          %s789 = sand.u32 %s94, 1
          %s790 = scalar_lea.sflag [#allocation3], %s789
          %s791 = sand.u32 %s94, 1
          %s792 = smul.addr %s791, 64
          %s793 = scalar_lea.vmem [#allocation2], %s792
          %794 = dma.done %s790, 1024
        $region44: #{tpu_custom_call.1} parent=39 // pred_fallthru
          _
      $region40: #{tpu_custom_call.1} parent=5 // pred_fallthru
        _
    $region6: #{tpu_custom_call.1} parent=1 // loop_footer
      %s16 = sadd.s32 1, %s12
    $region7: #{tpu_custom_call.1} parent=1 // loop_footer_branch
      %11 = sbr.rel target = $region3
    $region8: #{tpu_custom_call.1} parent=1 // loop_exit
      _
    %795 = vsyncpa [#allocation3], 1
    %s796 = scalar_lea.sflag [#allocation3], 1
    %797 = vsyncpa %s796, 1

</llo_original>
